<compile_context>
chip_gen: v6e
topology: v6e:2x2x1
jax: 0.10.0
libtpu: 0.0.40
codegen_flags: <defaults>
</compile_context>

<pallas_src>
import functools
import math

import jax
import jax.numpy as jnp
from jax.experimental import pallas as pl
from jax.experimental.pallas import tpu as pltpu


# ----------------------------- Pallas kernels -----------------------------

def _fused_linear_kernel(*refs, ln, activation, has_residual, eps):
    """Tiled: [optional LayerNorm(x)] @ W + b [+GELU] [+residual].

    Grid = (M tiles, N tiles, K tiles); accumulator lives in VMEM scratch.
    When ln=True the wrapper guarantees tk == K (full row visible for mean/var).
    """
    idx = 0
    x_ref = refs[idx]; idx += 1
    w_ref = refs[idx]; idx += 1
    b_ref = refs[idx]; idx += 1
    if ln:
        g_ref = refs[idx]; idx += 1
        be_ref = refs[idx]; idx += 1
    if has_residual:
        r_ref = refs[idx]; idx += 1
    o_ref = refs[idx]; idx += 1
    acc_ref = refs[idx]

    k_id = pl.program_id(2)

    @pl.when(k_id == 0)
    def _():
        acc_ref[...] = jnp.zeros_like(acc_ref)

    x = x_ref[...].astype(jnp.float32)
    if ln:
        mean = jnp.mean(x, axis=-1, keepdims=True)
        xc = x - mean
        var = jnp.mean(xc * xc, axis=-1, keepdims=True)   # biased var, like torch
        x = xc * jax.lax.rsqrt(var + eps) * g_ref[...] + be_ref[...]

    # bf16 MXU inputs, f32 accumulation.
    acc_ref[...] += jnp.dot(x.astype(jnp.bfloat16), w_ref[...],
                            preferred_element_type=jnp.float32)

    @pl.when(k_id == pl.num_programs(2) - 1)
    def _():
        y = acc_ref[...] + b_ref[...]
        if activation == "gelu":
            # TODO(synk): HF ViT uses exact erf-GELU; tanh approximation kept
            # here for guaranteed Mosaic lowering of the transcendental.
            c = math.sqrt(2.0 / math.pi)
            y = 0.5 * y * (1.0 + jnp.tanh(c * (y + 0.044715 * y * y * y)))
        if has_residual:
            y = y + r_ref[...]
        o_ref[...] = y.astype(o_ref.dtype)


def _round_up(x, m):
    return ((x + m - 1) // m) * m


def _tile(dim, cap, align):
    """Largest aligned divisor of `dim` that is <= cap (or the full dim)."""
    if dim <= cap:
        return dim
    t = (cap // align) * align
    while t >= align:
        if dim % t == 0:
            return t
        t -= align
    return dim


def fused_linear(x, w, b, *, gamma=None, beta=None, residual=None,
                 activation=None, eps=1e-12):
    """y = [LN(x)] @ w + b [+GELU] [+residual].  x:(M,K) f32, w:(K,N) bf16."""
    M, K = x.shape
    Kw, N = w.shape
    assert K == Kw
    ln = gamma is not None
    has_res = residual is not None

    # Lane-dense output: pad N up to a multiple of 128 (e.g. the 10-class head),
    # slice the valid columns back off afterwards.
    Np = _round_up(max(N, 128), 128)
    if Np != N:
        w = jnp.pad(w, ((0, 0), (0, Np - N)))
        b = jnp.pad(b, (0, Np - N))
        if has_res:
            residual = jnp.pad(residual, ((0, 0), (0, Np - N)))

    # Conservative tile caps: ~2*(tm*tk*4 + tk*tn*2) + 3*tm*tn*4 stays well
    # below v7x's 64 MiB VMEM (and the 32 MiB scoped limit we request below).
    tm = _tile(M, 256, 8)
    tn = _tile(Np, 512, 128)
    tk = K if ln else _tile(K, 512, 128)   # LN needs the full row per tile
    grid = (M // tm, Np // tn, K // tk)

    in_specs = [
        pl.BlockSpec((tm, tk), lambda i, j, k: (i, k)),
        pl.BlockSpec((tk, tn), lambda i, j, k: (k, j)),
        pl.BlockSpec((1, tn), lambda i, j, k: (0, j)),
    ]
    inputs = [x, w, b.reshape(1, Np)]
    if ln:
        in_specs += [pl.BlockSpec((1, K), lambda i, j, k: (0, 0)),
                     pl.BlockSpec((1, K), lambda i, j, k: (0, 0))]
        inputs += [gamma.reshape(1, K), beta.reshape(1, K)]
    if has_res:
        in_specs.append(pl.BlockSpec((tm, tn), lambda i, j, k: (i, j)))
        inputs.append(residual)

    kernel = functools.partial(_fused_linear_kernel, ln=ln, activation=activation,
                               has_residual=has_res, eps=eps)

    flops = 2 * M * Np * K
    bytes_accessed = (M * K * x.dtype.itemsize + K * Np * w.dtype.itemsize
                      + M * Np * 4 + (M * Np * 4 if has_res else 0))
    transcendentals = M * Np if activation == "gelu" else 0

    out = pl.pallas_call(
        kernel,
        out_shape=jax.ShapeDtypeStruct((M, Np), jnp.float32),
        grid=grid,
        in_specs=in_specs,
        out_specs=pl.BlockSpec((tm, tn), lambda i, j, k: (i, j)),
        scratch_shapes=[pltpu.VMEM((tm, tn), jnp.float32)],
        compiler_params=pltpu.CompilerParams(
            dimension_semantics=("parallel", "parallel", "arbitrary"),
            vmem_limit_bytes=32 * 1024 * 1024),
        cost_estimate=pl.CostEstimate(flops=flops,
                                      transcendentals=transcendentals,
                                      bytes_accessed=bytes_accessed),
    )(*inputs)
    return out[:, :N] if Np != N else out


def _attention_kernel(q_ref, k_ref, v_ref, o_ref, *, scale):
    # Batched over all heads of one image: refs are (H, S, Dh).
    q = (q_ref[...].astype(jnp.float32) * scale).astype(jnp.bfloat16)
    k = k_ref[...].astype(jnp.bfloat16)
    v = v_ref[...].astype(jnp.bfloat16)
    # einsum contracts q/k last dims directly -> no K transpose materialized.
    s = jnp.einsum("hqd,hkd->hqk", q, k, preferred_element_type=jnp.float32)
    s = s - jnp.max(s, axis=-1, keepdims=True)
    p = jnp.exp(s)
    denom = jnp.sum(p, axis=-1, keepdims=True)
    p = p * pl.reciprocal(denom, approx=True)
    o = jnp.einsum("hqk,hkd->hqd", p.astype(jnp.bfloat16), v,
                   preferred_element_type=jnp.float32)
    o_ref[...] = o.astype(o_ref.dtype)


def attention(q, k, v):
    """q,k,v: (B, H, S, Dh) -> (B, H, S, Dh). Grid over batch; heads batched
    inside one kernel step to amortize the ~0.35us per-step overhead."""
    B, H, S, Dh = q.shape
    scale = 1.0 / math.sqrt(Dh)
    kernel = functools.partial(_attention_kernel, scale=scale)
    spec = pl.BlockSpec((None, H, S, Dh), lambda b: (b, 0, 0, 0))
    return pl.pallas_call(
        kernel,
        out_shape=jax.ShapeDtypeStruct((B, H, S, Dh), jnp.float32),
        grid=(B,),
        in_specs=[spec, spec, spec],
        out_specs=spec,
        compiler_params=pltpu.CompilerParams(
            dimension_semantics=("parallel",)),
    )(q, k, v)


# ----------------------------- model (glue) --------------------------------

CFG = dict(
    image_size=16,
    patch_size=8,
    num_channels=3,
    hidden_size=32,
    num_heads=4,
    num_layers=2,
    intermediate_size=64,
    num_classes=10,
    layer_norm_eps=1e-12,
)


def init_params(key, cfg):
    D = cfg["hidden_size"]
    C = cfg["num_channels"]
    P = cfg["patch_size"]
    I = cfg["intermediate_size"]
    NC = cfg["num_classes"]
    num_patches = (cfg["image_size"] // P) ** 2
    S = num_patches + 1

    def normal(k, shape, scale=0.02):
        return scale * jax.random.normal(k, shape, dtype=jnp.float32)

    keys = iter(jax.random.split(key, 16 + 12 * cfg["num_layers"]))
    params = {
        "patch_w": normal(next(keys), (C * P * P, D)),
        "patch_b": jnp.zeros((D,), jnp.float32),
        "cls_token": normal(next(keys), (1, 1, D)),
        "pos_emb": normal(next(keys), (1, S, D)),
        "ln_f_g": jnp.ones((D,), jnp.float32),
        "ln_f_b": jnp.zeros((D,), jnp.float32),
        "head_w": normal(next(keys), (D, NC)),
        "head_b": jnp.zeros((NC,), jnp.float32),
        "layers": [],
    }
    for _ in range(cfg["num_layers"]):
        layer = {
            "ln1_g": jnp.ones((D,), jnp.float32),
            "ln1_b": jnp.zeros((D,), jnp.float32),
            "wq": normal(next(keys), (D, D)), "bq": jnp.zeros((D,), jnp.float32),
            "wk": normal(next(keys), (D, D)), "bk": jnp.zeros((D,), jnp.float32),
            "wv": normal(next(keys), (D, D)), "bv": jnp.zeros((D,), jnp.float32),
            "wo": normal(next(keys), (D, D)), "bo": jnp.zeros((D,), jnp.float32),
            "ln2_g": jnp.ones((D,), jnp.float32),
            "ln2_b": jnp.zeros((D,), jnp.float32),
            "w1": normal(next(keys), (D, I)), "b1": jnp.zeros((I,), jnp.float32),
            "w2": normal(next(keys), (I, D)), "b2": jnp.zeros((D,), jnp.float32),
        }
        params["layers"].append(layer)
    return params


def prepare_params(params):
    """Offline weight transforms: fuse QKV into one (D,3D) matmul and cast all
    matmul weights to bf16 (MXU-native); biases / LN params stay f32."""
    prep = dict(params)
    prep["patch_w"] = params["patch_w"].astype(jnp.bfloat16)
    prep["head_w"] = params["head_w"].astype(jnp.bfloat16)
    layers = []
    for lp in params["layers"]:
        l = dict(lp)
        l["wqkv"] = jnp.concatenate(
            [lp["wq"], lp["wk"], lp["wv"]], axis=1).astype(jnp.bfloat16)
        l["bqkv"] = jnp.concatenate([lp["bq"], lp["bk"], lp["bv"]])
        l["wo"] = lp["wo"].astype(jnp.bfloat16)
        l["w1"] = lp["w1"].astype(jnp.bfloat16)
        l["w2"] = lp["w2"].astype(jnp.bfloat16)
        layers.append(l)
    prep["layers"] = layers
    return prep


def patch_embed(pixel_values, params, cfg):
    """Conv2d(C, D, kernel=P, stride=P) == im2col (non-overlapping) + matmul."""
    B, C, H, W = pixel_values.shape
    P = cfg["patch_size"]
    Hp, Wp = H // P, W // P
    x = pixel_values.reshape(B, C, Hp, P, Wp, P)
    x = x.transpose(0, 2, 4, 1, 3, 5).reshape(B * Hp * Wp, C * P * P)
    emb = fused_linear(x, params["patch_w"], params["patch_b"])
    return emb.reshape(B, Hp * Wp, cfg["hidden_size"])


def encoder_layer(x, lp, cfg):
    B, S, D = x.shape
    H = cfg["num_heads"]
    Dh = D // H
    eps = cfg["layer_norm_eps"]

    xf = x.reshape(B * S, D)

    # LN1 fused into the single merged QKV projection.
    qkv = fused_linear(xf, lp["wqkv"], lp["bqkv"],
                       gamma=lp["ln1_g"], beta=lp["ln1_b"], eps=eps)  # (B*S, 3D)
    q, k, v = qkv[:, :D], qkv[:, D:2 * D], qkv[:, 2 * D:3 * D]

    def split_heads(t):
        return t.reshape(B, S, H, Dh).transpose(0, 2, 1, 3)  # (B,H,S,Dh)

    ctx = attention(split_heads(q), split_heads(k), split_heads(v))
    ctx = ctx.transpose(0, 2, 1, 3).reshape(B * S, D)

    # Out-projection with residual add fused into the epilogue.
    xf = fused_linear(ctx, lp["wo"], lp["bo"], residual=xf)

    # LN2 + MLP-up (+GELU) fused; MLP-down with residual fused.
    h = fused_linear(xf, lp["w1"], lp["b1"],
                     gamma=lp["ln2_g"], beta=lp["ln2_b"], eps=eps,
                     activation="gelu")
    xf = fused_linear(h, lp["w2"], lp["b2"], residual=xf)
    return xf.reshape(B, S, D)


def vit_forward(pixel_values, params, cfg):
    B = pixel_values.shape[0]
    D = cfg["hidden_size"]

    patches = patch_embed(pixel_values, params, cfg)          # (B, N, D)
    cls = jnp.broadcast_to(params["cls_token"], (B, 1, D))
    x = jnp.concatenate([cls, patches], axis=1)               # (B, S, D)
    x = x + params["pos_emb"]

    for lp in params["layers"]:
        x = encoder_layer(x, lp, cfg)

    # Final LayerNorm is row-wise, so LN(x)[:, 0] == LN(x[:, 0]): fuse it into
    # the classifier head matmul on the CLS rows only (padded to 128 lanes
    # inside fused_linear, sliced back to num_classes).
    cls_tok = x[:, 0]                                         # (B, D)
    logits = fused_linear(cls_tok, params["head_w"], params["head_b"],
                          gamma=params["ln_f_g"], beta=params["ln_f_b"],
                          eps=cfg["layer_norm_eps"])
    return logits                                             # (B, num_classes)


# ----------------------------------- main -----------------------------------

if __name__ == "__main__":
    key = jax.random.PRNGKey(0)
    pkey, xkey = jax.random.split(key)
    params = prepare_params(init_params(pkey, CFG))
    pixel_values = jax.random.normal(
        xkey, (2, CFG["num_channels"], CFG["image_size"], CFG["image_size"]),
        dtype=jnp.float32)

    forward = jax.jit(functools.partial(vit_forward, cfg=CFG))
    logits = forward(pixel_values, params)
    logits = jax.block_until_ready(logits)
    assert logits.shape == (2, CFG["num_classes"])
    assert bool(jnp.all(jnp.isfinite(logits)))
    print("KERNEL_OK")
</pallas_src>

<mosaic_0001>
module attributes {stable_mosaic.version = 11 : i64} {
  func.func @_fused_linear_kernel(%arg0: i32, %arg1: i32, %arg2: i32, %arg3: memref<8x192xf32, #tpu.memory_space<vmem>>, %arg4: memref<192x128xbf16, #tpu.memory_space<vmem>>, %arg5: memref<1x128xf32, #tpu.memory_space<vmem>>, %arg6: memref<8x128xf32, #tpu.memory_space<vmem>>, %arg7: memref<8x128xf32, #tpu.memory_space<vmem>>) attributes {dimension_semantics = [#tpu.dimension_semantics<parallel>, #tpu.dimension_semantics<parallel>, #tpu.dimension_semantics<arbitrary>], iteration_bounds = array<i64: 1, 1, 1>, scalar_prefetch = 0 : i64, scratch_operands = 1 : i64, tpu.core_type = #tpu.core_type<tc>, window_params = [{transform_indices = @transform_0, window_bounds = array<i64: 8, 192>}, {transform_indices = @transform_1, window_bounds = array<i64: 192, 128>}, {transform_indices = @transform_2, window_bounds = array<i64: 1, 128>}, {transform_indices = @transform_3, window_bounds = array<i64: 8, 128>}]} {
    %c0_i32 = arith.constant 0 : i32
    %0 = arith.cmpi eq, %arg2, %c0_i32 : i32
    %1 = arith.extui %0 : i1 to i32
    %c0_i32_0 = arith.constant 0 : i32
    %2 = arith.cmpi ne, %1, %c0_i32_0 : i32
    scf.if %2 {
      %cst_10 = arith.constant 0.000000e+00 : f32
      %13 = vector.broadcast %cst_10 : f32 to vector<8x128xf32>
      %c0_11 = arith.constant 0 : index
      %c0_12 = arith.constant 0 : index
      %14 = vector.load %arg7[%c0_11, %c0_12] : memref<8x128xf32, #tpu.memory_space<vmem>>, vector<8x128xf32>
      tpu.vector_store %arg7[%c0_11, %c0_12], %13 {strides = array<i32>} : memref<8x128xf32, #tpu.memory_space<vmem>>, vector<8x128xf32>,
    } else {
    }
    %c0 = arith.constant 0 : index
    %c0_1 = arith.constant 0 : index
    %3 = vector.load %arg3[%c0, %c0_1] : memref<8x192xf32, #tpu.memory_space<vmem>>, vector<8x192xf32>
    %c0_2 = arith.constant 0 : index
    %c0_3 = arith.constant 0 : index
    %4 = vector.load %arg7[%c0_2, %c0_3] : memref<8x128xf32, #tpu.memory_space<vmem>>, vector<8x128xf32>
    %5 = arith.truncf %3 : vector<8x192xf32> to vector<8x192xbf16>
    %c0_4 = arith.constant 0 : index
    %c0_5 = arith.constant 0 : index
    %6 = vector.load %arg4[%c0_4, %c0_5] : memref<192x128xbf16, #tpu.memory_space<vmem>>, vector<192x128xbf16>
    %cst = arith.constant dense<0.000000e+00> : vector<8x128xf32>
    %7 = tpu.matmul %5, %6, %cst {dimension_numbers = #tpu.dot_dimension_numbers<[1], [0], [0], [1], [0, 0, 1, 1], [], []>} : vector<8x192xbf16>, vector<192x128xbf16>, vector<8x128xf32> -> vector<8x128xf32>
    %8 = arith.addf %4, %7 : vector<8x128xf32>
    %c0_6 = arith.constant 0 : index
    %c0_7 = arith.constant 0 : index
    %9 = vector.load %arg7[%c0_6, %c0_7] : memref<8x128xf32, #tpu.memory_space<vmem>>, vector<8x128xf32>
    tpu.vector_store %arg7[%c0_6, %c0_7], %8 {strides = array<i32>} : memref<8x128xf32, #tpu.memory_space<vmem>>, vector<8x128xf32>,
    %c0_i32_8 = arith.constant 0 : i32
    %10 = arith.cmpi eq, %arg2, %c0_i32_8 : i32
    %11 = arith.extui %10 : i1 to i32
    %c0_i32_9 = arith.constant 0 : i32
    %12 = arith.cmpi ne, %11, %c0_i32_9 : i32
    scf.if %12 {
      %c0_10 = arith.constant 0 : index
      %c0_11 = arith.constant 0 : index
      %13 = vector.load %arg7[%c0_10, %c0_11] : memref<8x128xf32, #tpu.memory_space<vmem>>, vector<8x128xf32>
      %c0_12 = arith.constant 0 : index
      %c0_13 = arith.constant 0 : index
      %14 = vector.load %arg5[%c0_12, %c0_13] : memref<1x128xf32, #tpu.memory_space<vmem>>, vector<1x128xf32>
      %15 = vector.broadcast %14 : vector<1x128xf32> to vector<8x128xf32>
      %16 = arith.addf %13, %15 : vector<8x128xf32>
      %c0_14 = arith.constant 0 : index
      %c0_15 = arith.constant 0 : index
      %17 = vector.load %arg6[%c0_14, %c0_15] : memref<8x128xf32, #tpu.memory_space<vmem>>, vector<8x128xf32>
      tpu.vector_store %arg6[%c0_14, %c0_15], %16 {strides = array<i32>} : memref<8x128xf32, #tpu.memory_space<vmem>>, vector<8x128xf32>,
    } else {
    }
    return
  }
  func.func @transform_0(%arg0: i32, %arg1: i32, %arg2: i32) -> (i32, i32) {
    %c0_i32 = arith.constant 0 : i32
    return %arg0, %arg2 : i32, i32
  }
  func.func @transform_1(%arg0: i32, %arg1: i32, %arg2: i32) -> (i32, i32) {
    %c0_i32 = arith.constant 0 : i32
    return %arg2, %arg1 : i32, i32
  }
  func.func @transform_2(%arg0: i32, %arg1: i32, %arg2: i32) -> (i32, i32) {
    %c0_i32 = arith.constant 0 : i32
    %c0_i32_0 = arith.constant 0 : i32
    return %c0_i32, %arg1 : i32, i32
  }
  func.func @transform_3(%arg0: i32, %arg1: i32, %arg2: i32) -> (i32, i32) {
    %c0_i32 = arith.constant 0 : i32
    return %arg0, %arg1 : i32, i32
  }
}

module attributes {stable_mosaic.version = 11 : i64} {
  func.func @_fused_linear_kernel(%arg0: i32, %arg1: i32, %arg2: i32, %arg3: memref<10x32xf32, #tpu.memory_space<vmem>>, %arg4: memref<32x128xbf16, #tpu.memory_space<vmem>>, %arg5: memref<1x128xf32, #tpu.memory_space<vmem>>, %arg6: memref<1x32xf32, #tpu.memory_space<vmem>>, %arg7: memref<1x32xf32, #tpu.memory_space<vmem>>, %arg8: memref<10x128xf32, #tpu.memory_space<vmem>>, %arg9: memref<10x128xf32, #tpu.memory_space<vmem>>) attributes {dimension_semantics = [#tpu.dimension_semantics<parallel>, #tpu.dimension_semantics<parallel>, #tpu.dimension_semantics<arbitrary>], iteration_bounds = array<i64: 1, 1, 1>, scalar_prefetch = 0 : i64, scratch_operands = 1 : i64, tpu.core_type = #tpu.core_type<tc>, window_params = [{transform_indices = @transform_0, window_bounds = array<i64: 10, 32>}, {transform_indices = @transform_1, window_bounds = array<i64: 32, 128>}, {transform_indices = @transform_2, window_bounds = array<i64: 1, 128>}, {pipeline_mode = #tpu.pipeline_mode<synchronous>, transform_indices = @transform_3, window_bounds = array<i64: 1, 32>}, {pipeline_mode = #tpu.pipeline_mode<synchronous>, transform_indices = @transform_4, window_bounds = array<i64: 1, 32>}, {transform_indices = @transform_5, window_bounds = array<i64: 10, 128>}]} {
    %c0_i32 = arith.constant 0 : i32
    %0 = arith.cmpi eq, %arg2, %c0_i32 : i32
    %1 = arith.extui %0 : i1 to i32
    %c0_i32_0 = arith.constant 0 : i32
    %2 = arith.cmpi ne, %1, %c0_i32_0 : i32
    scf.if %2 {
      %cst_19 = arith.constant 0.000000e+00 : f32
      %35 = vector.broadcast %cst_19 : f32 to vector<10x128xf32>
      %c0_20 = arith.constant 0 : index
      %c0_21 = arith.constant 0 : index
      %36 = vector.load %arg9[%c0_20, %c0_21] : memref<10x128xf32, #tpu.memory_space<vmem>>, vector<10x128xf32>
      tpu.vector_store %arg9[%c0_20, %c0_21], %35 {strides = array<i32>} : memref<10x128xf32, #tpu.memory_space<vmem>>, vector<10x128xf32>,
    } else {
    }
    %c0 = arith.constant 0 : index
    %c0_1 = arith.constant 0 : index
    %3 = vector.load %arg3[%c0, %c0_1] : memref<10x32xf32, #tpu.memory_space<vmem>>, vector<10x32xf32>
    %cst = arith.constant dense<0.000000e+00> : vector<10xf32>
    %4 = vector.multi_reduction <add>, %3, %cst [1] : vector<10x32xf32> to vector<10xf32>
    %5 = vector.shape_cast %4 : vector<10xf32> to vector<10x1xf32>
    %cst_2 = arith.constant 3.200000e+01 : f32
    %6 = vector.broadcast %cst_2 : f32 to vector<10x1xf32>
    %7 = arith.divf %5, %6 : vector<10x1xf32>
    %8 = vector.broadcast %7 : vector<10x1xf32> to vector<10x32xf32>
    %9 = arith.subf %3, %8 : vector<10x32xf32>
    %10 = arith.mulf %9, %9 : vector<10x32xf32>
    %cst_3 = arith.constant dense<0.000000e+00> : vector<10xf32>
    %11 = vector.multi_reduction <add>, %10, %cst_3 [1] : vector<10x32xf32> to vector<10xf32>
    %12 = vector.shape_cast %11 : vector<10xf32> to vector<10x1xf32>
    %cst_4 = arith.constant 3.200000e+01 : f32
    %13 = vector.broadcast %cst_4 : f32 to vector<10x1xf32>
    %14 = arith.divf %12, %13 : vector<10x1xf32>
    %cst_5 = arith.constant 9.99999996E-13 : f32
    %15 = vector.broadcast %cst_5 : f32 to vector<10x1xf32>
    %16 = arith.addf %14, %15 : vector<10x1xf32>
    %17 = math.rsqrt %16 : vector<10x1xf32>
    %18 = vector.broadcast %17 : vector<10x1xf32> to vector<10x32xf32>
    %19 = arith.mulf %9, %18 : vector<10x32xf32>
    %c0_6 = arith.constant 0 : index
    %c0_7 = arith.constant 0 : index
    %20 = vector.load %arg6[%c0_6, %c0_7] : memref<1x32xf32, #tpu.memory_space<vmem>>, vector<1x32xf32>
    %21 = vector.broadcast %20 : vector<1x32xf32> to vector<10x32xf32>
    %22 = arith.mulf %19, %21 : vector<10x32xf32>
    %c0_8 = arith.constant 0 : index
    %c0_9 = arith.constant 0 : index
    %23 = vector.load %arg7[%c0_8, %c0_9] : memref<1x32xf32, #tpu.memory_space<vmem>>, vector<1x32xf32>
    %24 = vector.broadcast %23 : vector<1x32xf32> to vector<10x32xf32>
    %25 = arith.addf %22, %24 : vector<10x32xf32>
    %c0_10 = arith.constant 0 : index
    %c0_11 = arith.constant 0 : index
    %26 = vector.load %arg9[%c0_10, %c0_11] : memref<10x128xf32, #tpu.memory_space<vmem>>, vector<10x128xf32>
    %27 = arith.truncf %25 : vector<10x32xf32> to vector<10x32xbf16>
    %c0_12 = arith.constant 0 : index
    %c0_13 = arith.constant 0 : index
    %28 = vector.load %arg4[%c0_12, %c0_13] : memref<32x128xbf16, #tpu.memory_space<vmem>>, vector<32x128xbf16>
    %cst_14 = arith.constant dense<0.000000e+00> : vector<10x128xf32>
    %29 = tpu.matmul %27, %28, %cst_14 {dimension_numbers = #tpu.dot_dimension_numbers<[1], [0], [0], [1], [0, 0, 1, 1], [], []>} : vector<10x32xbf16>, vector<32x128xbf16>, vector<10x128xf32> -> vector<10x128xf32>
    %30 = arith.addf %26, %29 : vector<10x128xf32>
    %c0_15 = arith.constant 0 : index
    %c0_16 = arith.constant 0 : index
    %31 = vector.load %arg9[%c0_15, %c0_16] : memref<10x128xf32, #tpu.memory_space<vmem>>, vector<10x128xf32>
    tpu.vector_store %arg9[%c0_15, %c0_16], %30 {strides = array<i32>} : memref<10x128xf32, #tpu.memory_space<vmem>>, vector<10x128xf32>,
    %c0_i32_17 = arith.constant 0 : i32
    %32 = arith.cmpi eq, %arg2, %c0_i32_17 : i32
    %33 = arith.extui %32 : i1 to i32
    %c0_i32_18 = arith.constant 0 : i32
    %34 = arith.cmpi ne, %33, %c0_i32_18 : i32
    scf.if %34 {
      %c0_19 = arith.constant 0 : index
      %c0_20 = arith.constant 0 : index
      %35 = vector.load %arg9[%c0_19, %c0_20] : memref<10x128xf32, #tpu.memory_space<vmem>>, vector<10x128xf32>
      %c0_21 = arith.constant 0 : index
      %c0_22 = arith.constant 0 : index
      %36 = vector.load %arg5[%c0_21, %c0_22] : memref<1x128xf32, #tpu.memory_space<vmem>>, vector<1x128xf32>
      %37 = vector.broadcast %36 : vector<1x128xf32> to vector<10x128xf32>
      %38 = arith.addf %35, %37 : vector<10x128xf32>
      %c0_23 = arith.constant 0 : index
      %c0_24 = arith.constant 0 : index
      %39 = vector.load %arg8[%c0_23, %c0_24] : memref<10x128xf32, #tpu.memory_space<vmem>>, vector<10x128xf32>
      tpu.vector_store %arg8[%c0_23, %c0_24], %38 {strides = array<i32>} : memref<10x128xf32, #tpu.memory_space<vmem>>, vector<10x128xf32>,
    } else {
    }
    return
  }
  func.func @transform_0(%arg0: i32, %arg1: i32, %arg2: i32) -> (i32, i32) {
    %c0_i32 = arith.constant 0 : i32
    return %arg0, %arg2 : i32, i32
  }
  func.func @transform_1(%arg0: i32, %arg1: i32, %arg2: i32) -> (i32, i32) {
    %c0_i32 = arith.constant 0 : i32
    return %arg2, %arg1 : i32, i32
  }
  func.func @transform_2(%arg0: i32, %arg1: i32, %arg2: i32) -> (i32, i32) {
    %c0_i32 = arith.constant 0 : i32
    %c0_i32_0 = arith.constant 0 : i32
    return %c0_i32, %arg1 : i32, i32
  }
  func.func @transform_3(%arg0: i32, %arg1: i32, %arg2: i32) -> (i32, i32) {
    %c0_i32 = arith.constant 0 : i32
    %c0_i32_0 = arith.constant 0 : i32
    %c0_i32_1 = arith.constant 0 : i32
    return %c0_i32, %c0_i32_0 : i32, i32
  }
  func.func @transform_4(%arg0: i32, %arg1: i32, %arg2: i32) -> (i32, i32) {
    %c0_i32 = arith.constant 0 : i32
    %c0_i32_0 = arith.constant 0 : i32
    %c0_i32_1 = arith.constant 0 : i32
    return %c0_i32, %c0_i32_0 : i32, i32
  }
  func.func @transform_5(%arg0: i32, %arg1: i32, %arg2: i32) -> (i32, i32) {
    %c0_i32 = arith.constant 0 : i32
    return %arg0, %arg1 : i32, i32
  }
}

module attributes {stable_mosaic.version = 11 : i64} {
  func.func @_attention_kernel(%arg0: i32, %arg1: memref<1x4x5x8xf32, #tpu.memory_space<vmem>>, %arg2: memref<1x4x5x8xf32, #tpu.memory_space<vmem>>, %arg3: memref<1x4x5x8xf32, #tpu.memory_space<vmem>>, %arg4: memref<1x4x5x8xf32, #tpu.memory_space<vmem>>) attributes {dimension_semantics = [#tpu.dimension_semantics<parallel>], iteration_bounds = array<i64: 2>, scalar_prefetch = 0 : i64, scratch_operands = 0 : i64, tpu.core_type = #tpu.core_type<tc>, window_params = [{transform_indices = @transform_0, window_bounds = array<i64: 1, 4, 5, 8>}, {transform_indices = @transform_1, window_bounds = array<i64: 1, 4, 5, 8>}, {transform_indices = @transform_2, window_bounds = array<i64: 1, 4, 5, 8>}, {transform_indices = @transform_3, window_bounds = array<i64: 1, 4, 5, 8>}]} {
    %c0 = arith.constant 0 : index
    %c0_0 = arith.constant 0 : index
    %c0_1 = arith.constant 0 : index
    %c0_2 = arith.constant 0 : index
    %0 = vector.load %arg1[%c0, %c0_0, %c0_1, %c0_2] : memref<1x4x5x8xf32, #tpu.memory_space<vmem>>, vector<1x4x5x8xf32>
    %1 = vector.shape_cast %0 : vector<1x4x5x8xf32> to vector<4x5x8xf32>
    %cst = arith.constant 0.353553385 : f32
    %2 = vector.broadcast %cst : f32 to vector<4x5x8xf32>
    %3 = arith.mulf %1, %2 : vector<4x5x8xf32>
    %4 = arith.truncf %3 : vector<4x5x8xf32> to vector<4x5x8xbf16>
    %c0_3 = arith.constant 0 : index
    %c0_4 = arith.constant 0 : index
    %c0_5 = arith.constant 0 : index
    %c0_6 = arith.constant 0 : index
    %5 = vector.load %arg2[%c0_3, %c0_4, %c0_5, %c0_6] : memref<1x4x5x8xf32, #tpu.memory_space<vmem>>, vector<1x4x5x8xf32>
    %6 = vector.shape_cast %5 : vector<1x4x5x8xf32> to vector<4x5x8xf32>
    %7 = arith.truncf %6 : vector<4x5x8xf32> to vector<4x5x8xbf16>
    %c0_7 = arith.constant 0 : index
    %c0_8 = arith.constant 0 : index
    %c0_9 = arith.constant 0 : index
    %c0_10 = arith.constant 0 : index
    %8 = vector.load %arg3[%c0_7, %c0_8, %c0_9, %c0_10] : memref<1x4x5x8xf32, #tpu.memory_space<vmem>>, vector<1x4x5x8xf32>
    %9 = vector.shape_cast %8 : vector<1x4x5x8xf32> to vector<4x5x8xf32>
    %10 = arith.truncf %9 : vector<4x5x8xf32> to vector<4x5x8xbf16>
    "tpu.trace_start"() <{level = 10 : i32, message = "hqd,hkd->hqk"}> : () -> ()
    %cst_11 = arith.constant dense<0.000000e+00> : vector<4x5x5xf32>
    %11 = tpu.matmul %4, %7, %cst_11 {dimension_numbers = #tpu.dot_dimension_numbers<[2], [2], [1], [1], [0, 0, 0, 1, 1, 1], [0], [0]>} : vector<4x5x8xbf16>, vector<4x5x8xbf16>, vector<4x5x5xf32> -> vector<4x5x5xf32>
    "tpu.trace_stop"() : () -> ()
    %cst_12 = arith.constant dense<0xFF800000> : vector<4x5xf32>
    %12 = vector.multi_reduction <maximumf>, %11, %cst_12 [2] : vector<4x5x5xf32> to vector<4x5xf32>
    %13 = vector.shape_cast %12 : vector<4x5xf32> to vector<4x5x1xf32>
    %14 = vector.broadcast %13 : vector<4x5x1xf32> to vector<4x5x5xf32>
    %15 = arith.subf %11, %14 : vector<4x5x5xf32>
    %16 = math.exp %15 : vector<4x5x5xf32>
    %cst_13 = arith.constant dense<0.000000e+00> : vector<4x5xf32>
    %17 = vector.multi_reduction <add>, %16, %cst_13 [2] : vector<4x5x5xf32> to vector<4x5xf32>
    %18 = vector.shape_cast %17 : vector<4x5xf32> to vector<4x5x1xf32>
    %19 = tpu.reciprocal %18 {approx = true} : vector<4x5x1xf32> -> vector<4x5x1xf32>
    %20 = vector.broadcast %19 : vector<4x5x1xf32> to vector<4x5x5xf32>
    %21 = arith.mulf %16, %20 : vector<4x5x5xf32>
    %22 = arith.truncf %21 : vector<4x5x5xf32> to vector<4x5x5xbf16>
    "tpu.trace_start"() <{level = 10 : i32, message = "hqk,hkd->hqd"}> : () -> ()
    %cst_14 = arith.constant dense<0.000000e+00> : vector<4x5x8xf32>
    %23 = tpu.matmul %22, %10, %cst_14 {dimension_numbers = #tpu.dot_dimension_numbers<[2], [1], [1], [2], [0, 0, 0, 1, 1, 2], [0], [0]>} : vector<4x5x5xbf16>, vector<4x5x8xbf16>, vector<4x5x8xf32> -> vector<4x5x8xf32>
    "tpu.trace_stop"() : () -> ()
    %c0_15 = arith.constant 0 : index
    %c0_16 = arith.constant 0 : index
    %c0_17 = arith.constant 0 : index
    %c0_18 = arith.constant 0 : index
    %24 = vector.load %arg4[%c0_15, %c0_16, %c0_17, %c0_18] : memref<1x4x5x8xf32, #tpu.memory_space<vmem>>, vector<1x4x5x8xf32>
    %25 = vector.shape_cast %24 : vector<1x4x5x8xf32> to vector<4x5x8xf32>
    %26 = vector.shape_cast %23 : vector<4x5x8xf32> to vector<1x4x5x8xf32>
    tpu.vector_store %arg4[%c0_15, %c0_16, %c0_17, %c0_18], %26 {strides = array<i32>} : memref<1x4x5x8xf32, #tpu.memory_space<vmem>>, vector<1x4x5x8xf32>,
    return
  }
  func.func @transform_0(%arg0: i32) -> (i32, i32, i32, i32) {
    %c0_i32 = arith.constant 0 : i32
    %c0_i32_0 = arith.constant 0 : i32
    %c0_i32_1 = arith.constant 0 : i32
    %c0_i32_2 = arith.constant 0 : i32
    return %arg0, %c0_i32, %c0_i32_0, %c0_i32_1 : i32, i32, i32, i32
  }
  func.func @transform_1(%arg0: i32) -> (i32, i32, i32, i32) {
    %c0_i32 = arith.constant 0 : i32
    %c0_i32_0 = arith.constant 0 : i32
    %c0_i32_1 = arith.constant 0 : i32
    %c0_i32_2 = arith.constant 0 : i32
    return %arg0, %c0_i32, %c0_i32_0, %c0_i32_1 : i32, i32, i32, i32
  }
  func.func @transform_2(%arg0: i32) -> (i32, i32, i32, i32) {
    %c0_i32 = arith.constant 0 : i32
    %c0_i32_0 = arith.constant 0 : i32
    %c0_i32_1 = arith.constant 0 : i32
    %c0_i32_2 = arith.constant 0 : i32
    return %arg0, %c0_i32, %c0_i32_0, %c0_i32_1 : i32, i32, i32, i32
  }
  func.func @transform_3(%arg0: i32) -> (i32, i32, i32, i32) {
    %c0_i32 = arith.constant 0 : i32
    %c0_i32_0 = arith.constant 0 : i32
    %c0_i32_1 = arith.constant 0 : i32
    %c0_i32_2 = arith.constant 0 : i32
    return %arg0, %c0_i32, %c0_i32_0, %c0_i32_1 : i32, i32, i32, i32
  }
}

module attributes {stable_mosaic.version = 11 : i64} {
  func.func @_fused_linear_kernel(%arg0: i32, %arg1: i32, %arg2: i32, %arg3: memref<10x32xf32, #tpu.memory_space<vmem>>, %arg4: memref<32x128xbf16, #tpu.memory_space<vmem>>, %arg5: memref<1x128xf32, #tpu.memory_space<vmem>>, %arg6: memref<10x128xf32, #tpu.memory_space<vmem>>, %arg7: memref<10x128xf32, #tpu.memory_space<vmem>>, %arg8: memref<10x128xf32, #tpu.memory_space<vmem>>) attributes {dimension_semantics = [#tpu.dimension_semantics<parallel>, #tpu.dimension_semantics<parallel>, #tpu.dimension_semantics<arbitrary>], iteration_bounds = array<i64: 1, 1, 1>, scalar_prefetch = 0 : i64, scratch_operands = 1 : i64, tpu.core_type = #tpu.core_type<tc>, window_params = [{transform_indices = @transform_0, window_bounds = array<i64: 10, 32>}, {transform_indices = @transform_1, window_bounds = array<i64: 32, 128>}, {transform_indices = @transform_2, window_bounds = array<i64: 1, 128>}, {transform_indices = @transform_3, window_bounds = array<i64: 10, 128>}, {transform_indices = @transform_4, window_bounds = array<i64: 10, 128>}]} {
    %c0_i32 = arith.constant 0 : i32
    %0 = arith.cmpi eq, %arg2, %c0_i32 : i32
    %1 = arith.extui %0 : i1 to i32
    %c0_i32_0 = arith.constant 0 : i32
    %2 = arith.cmpi ne, %1, %c0_i32_0 : i32
    scf.if %2 {
      %cst_10 = arith.constant 0.000000e+00 : f32
      %13 = vector.broadcast %cst_10 : f32 to vector<10x128xf32>
      %c0_11 = arith.constant 0 : index
      %c0_12 = arith.constant 0 : index
      %14 = vector.load %arg8[%c0_11, %c0_12] : memref<10x128xf32, #tpu.memory_space<vmem>>, vector<10x128xf32>
      tpu.vector_store %arg8[%c0_11, %c0_12], %13 {strides = array<i32>} : memref<10x128xf32, #tpu.memory_space<vmem>>, vector<10x128xf32>,
    } else {
    }
    %c0 = arith.constant 0 : index
    %c0_1 = arith.constant 0 : index
    %3 = vector.load %arg3[%c0, %c0_1] : memref<10x32xf32, #tpu.memory_space<vmem>>, vector<10x32xf32>
    %c0_2 = arith.constant 0 : index
    %c0_3 = arith.constant 0 : index
    %4 = vector.load %arg8[%c0_2, %c0_3] : memref<10x128xf32, #tpu.memory_space<vmem>>, vector<10x128xf32>
    %5 = arith.truncf %3 : vector<10x32xf32> to vector<10x32xbf16>
    %c0_4 = arith.constant 0 : index
    %c0_5 = arith.constant 0 : index
    %6 = vector.load %arg4[%c0_4, %c0_5] : memref<32x128xbf16, #tpu.memory_space<vmem>>, vector<32x128xbf16>
    %cst = arith.constant dense<0.000000e+00> : vector<10x128xf32>
    %7 = tpu.matmul %5, %6, %cst {dimension_numbers = #tpu.dot_dimension_numbers<[1], [0], [0], [1], [0, 0, 1, 1], [], []>} : vector<10x32xbf16>, vector<32x128xbf16>, vector<10x128xf32> -> vector<10x128xf32>
    %8 = arith.addf %4, %7 : vector<10x128xf32>
    %c0_6 = arith.constant 0 : index
    %c0_7 = arith.constant 0 : index
    %9 = vector.load %arg8[%c0_6, %c0_7] : memref<10x128xf32, #tpu.memory_space<vmem>>, vector<10x128xf32>
    tpu.vector_store %arg8[%c0_6, %c0_7], %8 {strides = array<i32>} : memref<10x128xf32, #tpu.memory_space<vmem>>, vector<10x128xf32>,
    %c0_i32_8 = arith.constant 0 : i32
    %10 = arith.cmpi eq, %arg2, %c0_i32_8 : i32
    %11 = arith.extui %10 : i1 to i32
    %c0_i32_9 = arith.constant 0 : i32
    %12 = arith.cmpi ne, %11, %c0_i32_9 : i32
    scf.if %12 {
      %c0_10 = arith.constant 0 : index
      %c0_11 = arith.constant 0 : index
      %13 = vector.load %arg8[%c0_10, %c0_11] : memref<10x128xf32, #tpu.memory_space<vmem>>, vector<10x128xf32>
      %c0_12 = arith.constant 0 : index
      %c0_13 = arith.constant 0 : index
      %14 = vector.load %arg5[%c0_12, %c0_13] : memref<1x128xf32, #tpu.memory_space<vmem>>, vector<1x128xf32>
      %15 = vector.broadcast %14 : vector<1x128xf32> to vector<10x128xf32>
      %16 = arith.addf %13, %15 : vector<10x128xf32>
      %c0_14 = arith.constant 0 : index
      %c0_15 = arith.constant 0 : index
      %17 = vector.load %arg6[%c0_14, %c0_15] : memref<10x128xf32, #tpu.memory_space<vmem>>, vector<10x128xf32>
      %18 = arith.addf %16, %17 : vector<10x128xf32>
      %c0_16 = arith.constant 0 : index
      %c0_17 = arith.constant 0 : index
      %19 = vector.load %arg7[%c0_16, %c0_17] : memref<10x128xf32, #tpu.memory_space<vmem>>, vector<10x128xf32>
      tpu.vector_store %arg7[%c0_16, %c0_17], %18 {strides = array<i32>} : memref<10x128xf32, #tpu.memory_space<vmem>>, vector<10x128xf32>,
    } else {
    }
    return
  }
  func.func @transform_0(%arg0: i32, %arg1: i32, %arg2: i32) -> (i32, i32) {
    %c0_i32 = arith.constant 0 : i32
    return %arg0, %arg2 : i32, i32
  }
  func.func @transform_1(%arg0: i32, %arg1: i32, %arg2: i32) -> (i32, i32) {
    %c0_i32 = arith.constant 0 : i32
    return %arg2, %arg1 : i32, i32
  }
  func.func @transform_2(%arg0: i32, %arg1: i32, %arg2: i32) -> (i32, i32) {
    %c0_i32 = arith.constant 0 : i32
    %c0_i32_0 = arith.constant 0 : i32
    return %c0_i32, %arg1 : i32, i32
  }
  func.func @transform_3(%arg0: i32, %arg1: i32, %arg2: i32) -> (i32, i32) {
    %c0_i32 = arith.constant 0 : i32
    return %arg0, %arg1 : i32, i32
  }
  func.func @transform_4(%arg0: i32, %arg1: i32, %arg2: i32) -> (i32, i32) {
    %c0_i32 = arith.constant 0 : i32
    return %arg0, %arg1 : i32, i32
  }
}

module attributes {stable_mosaic.version = 11 : i64} {
  func.func @_fused_linear_kernel(%arg0: i32, %arg1: i32, %arg2: i32, %arg3: memref<10x64xf32, #tpu.memory_space<vmem>>, %arg4: memref<64x128xbf16, #tpu.memory_space<vmem>>, %arg5: memref<1x128xf32, #tpu.memory_space<vmem>>, %arg6: memref<10x128xf32, #tpu.memory_space<vmem>>, %arg7: memref<10x128xf32, #tpu.memory_space<vmem>>, %arg8: memref<10x128xf32, #tpu.memory_space<vmem>>) attributes {dimension_semantics = [#tpu.dimension_semantics<parallel>, #tpu.dimension_semantics<parallel>, #tpu.dimension_semantics<arbitrary>], iteration_bounds = array<i64: 1, 1, 1>, scalar_prefetch = 0 : i64, scratch_operands = 1 : i64, tpu.core_type = #tpu.core_type<tc>, window_params = [{transform_indices = @transform_0, window_bounds = array<i64: 10, 64>}, {transform_indices = @transform_1, window_bounds = array<i64: 64, 128>}, {transform_indices = @transform_2, window_bounds = array<i64: 1, 128>}, {transform_indices = @transform_3, window_bounds = array<i64: 10, 128>}, {transform_indices = @transform_4, window_bounds = array<i64: 10, 128>}]} {
    %c0_i32 = arith.constant 0 : i32
    %0 = arith.cmpi eq, %arg2, %c0_i32 : i32
    %1 = arith.extui %0 : i1 to i32
    %c0_i32_0 = arith.constant 0 : i32
    %2 = arith.cmpi ne, %1, %c0_i32_0 : i32
    scf.if %2 {
      %cst_10 = arith.constant 0.000000e+00 : f32
      %13 = vector.broadcast %cst_10 : f32 to vector<10x128xf32>
      %c0_11 = arith.constant 0 : index
      %c0_12 = arith.constant 0 : index
      %14 = vector.load %arg8[%c0_11, %c0_12] : memref<10x128xf32, #tpu.memory_space<vmem>>, vector<10x128xf32>
      tpu.vector_store %arg8[%c0_11, %c0_12], %13 {strides = array<i32>} : memref<10x128xf32, #tpu.memory_space<vmem>>, vector<10x128xf32>,
    } else {
    }
    %c0 = arith.constant 0 : index
    %c0_1 = arith.constant 0 : index
    %3 = vector.load %arg3[%c0, %c0_1] : memref<10x64xf32, #tpu.memory_space<vmem>>, vector<10x64xf32>
    %c0_2 = arith.constant 0 : index
    %c0_3 = arith.constant 0 : index
    %4 = vector.load %arg8[%c0_2, %c0_3] : memref<10x128xf32, #tpu.memory_space<vmem>>, vector<10x128xf32>
    %5 = arith.truncf %3 : vector<10x64xf32> to vector<10x64xbf16>
    %c0_4 = arith.constant 0 : index
    %c0_5 = arith.constant 0 : index
    %6 = vector.load %arg4[%c0_4, %c0_5] : memref<64x128xbf16, #tpu.memory_space<vmem>>, vector<64x128xbf16>
    %cst = arith.constant dense<0.000000e+00> : vector<10x128xf32>
    %7 = tpu.matmul %5, %6, %cst {dimension_numbers = #tpu.dot_dimension_numbers<[1], [0], [0], [1], [0, 0, 1, 1], [], []>} : vector<10x64xbf16>, vector<64x128xbf16>, vector<10x128xf32> -> vector<10x128xf32>
    %8 = arith.addf %4, %7 : vector<10x128xf32>
    %c0_6 = arith.constant 0 : index
    %c0_7 = arith.constant 0 : index
    %9 = vector.load %arg8[%c0_6, %c0_7] : memref<10x128xf32, #tpu.memory_space<vmem>>, vector<10x128xf32>
    tpu.vector_store %arg8[%c0_6, %c0_7], %8 {strides = array<i32>} : memref<10x128xf32, #tpu.memory_space<vmem>>, vector<10x128xf32>,
    %c0_i32_8 = arith.constant 0 : i32
    %10 = arith.cmpi eq, %arg2, %c0_i32_8 : i32
    %11 = arith.extui %10 : i1 to i32
    %c0_i32_9 = arith.constant 0 : i32
    %12 = arith.cmpi ne, %11, %c0_i32_9 : i32
    scf.if %12 {
      %c0_10 = arith.constant 0 : index
      %c0_11 = arith.constant 0 : index
      %13 = vector.load %arg8[%c0_10, %c0_11] : memref<10x128xf32, #tpu.memory_space<vmem>>, vector<10x128xf32>
      %c0_12 = arith.constant 0 : index
      %c0_13 = arith.constant 0 : index
      %14 = vector.load %arg5[%c0_12, %c0_13] : memref<1x128xf32, #tpu.memory_space<vmem>>, vector<1x128xf32>
      %15 = vector.broadcast %14 : vector<1x128xf32> to vector<10x128xf32>
      %16 = arith.addf %13, %15 : vector<10x128xf32>
      %c0_14 = arith.constant 0 : index
      %c0_15 = arith.constant 0 : index
      %17 = vector.load %arg6[%c0_14, %c0_15] : memref<10x128xf32, #tpu.memory_space<vmem>>, vector<10x128xf32>
      %18 = arith.addf %16, %17 : vector<10x128xf32>
      %c0_16 = arith.constant 0 : index
      %c0_17 = arith.constant 0 : index
      %19 = vector.load %arg7[%c0_16, %c0_17] : memref<10x128xf32, #tpu.memory_space<vmem>>, vector<10x128xf32>
      tpu.vector_store %arg7[%c0_16, %c0_17], %18 {strides = array<i32>} : memref<10x128xf32, #tpu.memory_space<vmem>>, vector<10x128xf32>,
    } else {
    }
    return
  }
  func.func @transform_0(%arg0: i32, %arg1: i32, %arg2: i32) -> (i32, i32) {
    %c0_i32 = arith.constant 0 : i32
    return %arg0, %arg2 : i32, i32
  }
  func.func @transform_1(%arg0: i32, %arg1: i32, %arg2: i32) -> (i32, i32) {
    %c0_i32 = arith.constant 0 : i32
    return %arg2, %arg1 : i32, i32
  }
  func.func @transform_2(%arg0: i32, %arg1: i32, %arg2: i32) -> (i32, i32) {
    %c0_i32 = arith.constant 0 : i32
    %c0_i32_0 = arith.constant 0 : i32
    return %c0_i32, %arg1 : i32, i32
  }
  func.func @transform_3(%arg0: i32, %arg1: i32, %arg2: i32) -> (i32, i32) {
    %c0_i32 = arith.constant 0 : i32
    return %arg0, %arg1 : i32, i32
  }
  func.func @transform_4(%arg0: i32, %arg1: i32, %arg2: i32) -> (i32, i32) {
    %c0_i32 = arith.constant 0 : i32
    return %arg0, %arg1 : i32, i32
  }
}

module attributes {stable_mosaic.version = 11 : i64} {
  func.func @_fused_linear_kernel(%arg0: i32, %arg1: i32, %arg2: i32, %arg3: memref<10x32xf32, #tpu.memory_space<vmem>>, %arg4: memref<32x128xbf16, #tpu.memory_space<vmem>>, %arg5: memref<1x128xf32, #tpu.memory_space<vmem>>, %arg6: memref<1x32xf32, #tpu.memory_space<vmem>>, %arg7: memref<1x32xf32, #tpu.memory_space<vmem>>, %arg8: memref<10x128xf32, #tpu.memory_space<vmem>>, %arg9: memref<10x128xf32, #tpu.memory_space<vmem>>) attributes {dimension_semantics = [#tpu.dimension_semantics<parallel>, #tpu.dimension_semantics<parallel>, #tpu.dimension_semantics<arbitrary>], iteration_bounds = array<i64: 1, 1, 1>, scalar_prefetch = 0 : i64, scratch_operands = 1 : i64, tpu.core_type = #tpu.core_type<tc>, window_params = [{transform_indices = @transform_0, window_bounds = array<i64: 10, 32>}, {transform_indices = @transform_1, window_bounds = array<i64: 32, 128>}, {transform_indices = @transform_2, window_bounds = array<i64: 1, 128>}, {pipeline_mode = #tpu.pipeline_mode<synchronous>, transform_indices = @transform_3, window_bounds = array<i64: 1, 32>}, {pipeline_mode = #tpu.pipeline_mode<synchronous>, transform_indices = @transform_4, window_bounds = array<i64: 1, 32>}, {transform_indices = @transform_5, window_bounds = array<i64: 10, 128>}]} {
    %c0_i32 = arith.constant 0 : i32
    %0 = arith.cmpi eq, %arg2, %c0_i32 : i32
    %1 = arith.extui %0 : i1 to i32
    %c0_i32_0 = arith.constant 0 : i32
    %2 = arith.cmpi ne, %1, %c0_i32_0 : i32
    scf.if %2 {
      %cst_19 = arith.constant 0.000000e+00 : f32
      %35 = vector.broadcast %cst_19 : f32 to vector<10x128xf32>
      %c0_20 = arith.constant 0 : index
      %c0_21 = arith.constant 0 : index
      %36 = vector.load %arg9[%c0_20, %c0_21] : memref<10x128xf32, #tpu.memory_space<vmem>>, vector<10x128xf32>
      tpu.vector_store %arg9[%c0_20, %c0_21], %35 {strides = array<i32>} : memref<10x128xf32, #tpu.memory_space<vmem>>, vector<10x128xf32>,
    } else {
    }
    %c0 = arith.constant 0 : index
    %c0_1 = arith.constant 0 : index
    %3 = vector.load %arg3[%c0, %c0_1] : memref<10x32xf32, #tpu.memory_space<vmem>>, vector<10x32xf32>
    %cst = arith.constant dense<0.000000e+00> : vector<10xf32>
    %4 = vector.multi_reduction <add>, %3, %cst [1] : vector<10x32xf32> to vector<10xf32>
    %5 = vector.shape_cast %4 : vector<10xf32> to vector<10x1xf32>
    %cst_2 = arith.constant 3.200000e+01 : f32
    %6 = vector.broadcast %cst_2 : f32 to vector<10x1xf32>
    %7 = arith.divf %5, %6 : vector<10x1xf32>
    %8 = vector.broadcast %7 : vector<10x1xf32> to vector<10x32xf32>
    %9 = arith.subf %3, %8 : vector<10x32xf32>
    %10 = arith.mulf %9, %9 : vector<10x32xf32>
    %cst_3 = arith.constant dense<0.000000e+00> : vector<10xf32>
    %11 = vector.multi_reduction <add>, %10, %cst_3 [1] : vector<10x32xf32> to vector<10xf32>
    %12 = vector.shape_cast %11 : vector<10xf32> to vector<10x1xf32>
    %cst_4 = arith.constant 3.200000e+01 : f32
    %13 = vector.broadcast %cst_4 : f32 to vector<10x1xf32>
    %14 = arith.divf %12, %13 : vector<10x1xf32>
    %cst_5 = arith.constant 9.99999996E-13 : f32
    %15 = vector.broadcast %cst_5 : f32 to vector<10x1xf32>
    %16 = arith.addf %14, %15 : vector<10x1xf32>
    %17 = math.rsqrt %16 : vector<10x1xf32>
    %18 = vector.broadcast %17 : vector<10x1xf32> to vector<10x32xf32>
    %19 = arith.mulf %9, %18 : vector<10x32xf32>
    %c0_6 = arith.constant 0 : index
    %c0_7 = arith.constant 0 : index
    %20 = vector.load %arg6[%c0_6, %c0_7] : memref<1x32xf32, #tpu.memory_space<vmem>>, vector<1x32xf32>
    %21 = vector.broadcast %20 : vector<1x32xf32> to vector<10x32xf32>
    %22 = arith.mulf %19, %21 : vector<10x32xf32>
    %c0_8 = arith.constant 0 : index
    %c0_9 = arith.constant 0 : index
    %23 = vector.load %arg7[%c0_8, %c0_9] : memref<1x32xf32, #tpu.memory_space<vmem>>, vector<1x32xf32>
    %24 = vector.broadcast %23 : vector<1x32xf32> to vector<10x32xf32>
    %25 = arith.addf %22, %24 : vector<10x32xf32>
    %c0_10 = arith.constant 0 : index
    %c0_11 = arith.constant 0 : index
    %26 = vector.load %arg9[%c0_10, %c0_11] : memref<10x128xf32, #tpu.memory_space<vmem>>, vector<10x128xf32>
    %27 = arith.truncf %25 : vector<10x32xf32> to vector<10x32xbf16>
    %c0_12 = arith.constant 0 : index
    %c0_13 = arith.constant 0 : index
    %28 = vector.load %arg4[%c0_12, %c0_13] : memref<32x128xbf16, #tpu.memory_space<vmem>>, vector<32x128xbf16>
    %cst_14 = arith.constant dense<0.000000e+00> : vector<10x128xf32>
    %29 = tpu.matmul %27, %28, %cst_14 {dimension_numbers = #tpu.dot_dimension_numbers<[1], [0], [0], [1], [0, 0, 1, 1], [], []>} : vector<10x32xbf16>, vector<32x128xbf16>, vector<10x128xf32> -> vector<10x128xf32>
    %30 = arith.addf %26, %29 : vector<10x128xf32>
    %c0_15 = arith.constant 0 : index
    %c0_16 = arith.constant 0 : index
    %31 = vector.load %arg9[%c0_15, %c0_16] : memref<10x128xf32, #tpu.memory_space<vmem>>, vector<10x128xf32>
    tpu.vector_store %arg9[%c0_15, %c0_16], %30 {strides = array<i32>} : memref<10x128xf32, #tpu.memory_space<vmem>>, vector<10x128xf32>,
    %c0_i32_17 = arith.constant 0 : i32
    %32 = arith.cmpi eq, %arg2, %c0_i32_17 : i32
    %33 = arith.extui %32 : i1 to i32
    %c0_i32_18 = arith.constant 0 : i32
    %34 = arith.cmpi ne, %33, %c0_i32_18 : i32
    scf.if %34 {
      %c0_19 = arith.constant 0 : index
      %c0_20 = arith.constant 0 : index
      %35 = vector.load %arg9[%c0_19, %c0_20] : memref<10x128xf32, #tpu.memory_space<vmem>>, vector<10x128xf32>
      %c0_21 = arith.constant 0 : index
      %c0_22 = arith.constant 0 : index
      %36 = vector.load %arg5[%c0_21, %c0_22] : memref<1x128xf32, #tpu.memory_space<vmem>>, vector<1x128xf32>
      %37 = vector.broadcast %36 : vector<1x128xf32> to vector<10x128xf32>
      %38 = arith.addf %35, %37 : vector<10x128xf32>
      %cst_23 = arith.constant 5.000000e-01 : f32
      %39 = vector.broadcast %cst_23 : f32 to vector<10x128xf32>
      %40 = arith.mulf %39, %38 : vector<10x128xf32>
      %cst_24 = arith.constant 4.471500e-02 : f32
      %41 = vector.broadcast %cst_24 : f32 to vector<10x128xf32>
      %42 = arith.mulf %41, %38 : vector<10x128xf32>
      %43 = arith.mulf %42, %38 : vector<10x128xf32>
      %44 = arith.mulf %43, %38 : vector<10x128xf32>
      %45 = arith.addf %38, %44 : vector<10x128xf32>
      %cst_25 = arith.constant 0.797884583 : f32
      %46 = vector.broadcast %cst_25 : f32 to vector<10x128xf32>
      %47 = arith.mulf %46, %45 : vector<10x128xf32>
      %48 = math.tanh %47 : vector<10x128xf32>
      %cst_26 = arith.constant 1.000000e+00 : f32
      %49 = vector.broadcast %cst_26 : f32 to vector<10x128xf32>
      %50 = arith.addf %49, %48 : vector<10x128xf32>
      %51 = arith.mulf %40, %50 : vector<10x128xf32>
      %c0_27 = arith.constant 0 : index
      %c0_28 = arith.constant 0 : index
      %52 = vector.load %arg8[%c0_27, %c0_28] : memref<10x128xf32, #tpu.memory_space<vmem>>, vector<10x128xf32>
      tpu.vector_store %arg8[%c0_27, %c0_28], %51 {strides = array<i32>} : memref<10x128xf32, #tpu.memory_space<vmem>>, vector<10x128xf32>,
    } else {
    }
    return
  }
  func.func @transform_0(%arg0: i32, %arg1: i32, %arg2: i32) -> (i32, i32) {
    %c0_i32 = arith.constant 0 : i32
    return %arg0, %arg2 : i32, i32
  }
  func.func @transform_1(%arg0: i32, %arg1: i32, %arg2: i32) -> (i32, i32) {
    %c0_i32 = arith.constant 0 : i32
    return %arg2, %arg1 : i32, i32
  }
  func.func @transform_2(%arg0: i32, %arg1: i32, %arg2: i32) -> (i32, i32) {
    %c0_i32 = arith.constant 0 : i32
    %c0_i32_0 = arith.constant 0 : i32
    return %c0_i32, %arg1 : i32, i32
  }
  func.func @transform_3(%arg0: i32, %arg1: i32, %arg2: i32) -> (i32, i32) {
    %c0_i32 = arith.constant 0 : i32
    %c0_i32_0 = arith.constant 0 : i32
    %c0_i32_1 = arith.constant 0 : i32
    return %c0_i32, %c0_i32_0 : i32, i32
  }
  func.func @transform_4(%arg0: i32, %arg1: i32, %arg2: i32) -> (i32, i32) {
    %c0_i32 = arith.constant 0 : i32
    %c0_i32_0 = arith.constant 0 : i32
    %c0_i32_1 = arith.constant 0 : i32
    return %c0_i32, %c0_i32_0 : i32, i32
  }
  func.func @transform_5(%arg0: i32, %arg1: i32, %arg2: i32) -> (i32, i32) {
    %c0_i32 = arith.constant 0 : i32
    return %arg0, %arg1 : i32, i32
  }
}

module attributes {stable_mosaic.version = 11 : i64} {
  func.func @_fused_linear_kernel(%arg0: i32, %arg1: i32, %arg2: i32, %arg3: memref<2x32xf32, #tpu.memory_space<vmem>>, %arg4: memref<32x128xbf16, #tpu.memory_space<vmem>>, %arg5: memref<1x128xf32, #tpu.memory_space<vmem>>, %arg6: memref<1x32xf32, #tpu.memory_space<vmem>>, %arg7: memref<1x32xf32, #tpu.memory_space<vmem>>, %arg8: memref<2x128xf32, #tpu.memory_space<vmem>>, %arg9: memref<2x128xf32, #tpu.memory_space<vmem>>) attributes {dimension_semantics = [#tpu.dimension_semantics<parallel>, #tpu.dimension_semantics<parallel>, #tpu.dimension_semantics<arbitrary>], iteration_bounds = array<i64: 1, 1, 1>, scalar_prefetch = 0 : i64, scratch_operands = 1 : i64, tpu.core_type = #tpu.core_type<tc>, window_params = [{transform_indices = @transform_0, window_bounds = array<i64: 2, 32>}, {transform_indices = @transform_1, window_bounds = array<i64: 32, 128>}, {transform_indices = @transform_2, window_bounds = array<i64: 1, 128>}, {pipeline_mode = #tpu.pipeline_mode<synchronous>, transform_indices = @transform_3, window_bounds = array<i64: 1, 32>}, {pipeline_mode = #tpu.pipeline_mode<synchronous>, transform_indices = @transform_4, window_bounds = array<i64: 1, 32>}, {transform_indices = @transform_5, window_bounds = array<i64: 2, 128>}]} {
    %c0_i32 = arith.constant 0 : i32
    %0 = arith.cmpi eq, %arg2, %c0_i32 : i32
    %1 = arith.extui %0 : i1 to i32
    %c0_i32_0 = arith.constant 0 : i32
    %2 = arith.cmpi ne, %1, %c0_i32_0 : i32
    scf.if %2 {
      %cst_19 = arith.constant 0.000000e+00 : f32
      %35 = vector.broadcast %cst_19 : f32 to vector<2x128xf32>
      %c0_20 = arith.constant 0 : index
      %c0_21 = arith.constant 0 : index
      %36 = vector.load %arg9[%c0_20, %c0_21] : memref<2x128xf32, #tpu.memory_space<vmem>>, vector<2x128xf32>
      tpu.vector_store %arg9[%c0_20, %c0_21], %35 {strides = array<i32>} : memref<2x128xf32, #tpu.memory_space<vmem>>, vector<2x128xf32>,
    } else {
    }
    %c0 = arith.constant 0 : index
    %c0_1 = arith.constant 0 : index
    %3 = vector.load %arg3[%c0, %c0_1] : memref<2x32xf32, #tpu.memory_space<vmem>>, vector<2x32xf32>
    %cst = arith.constant dense<0.000000e+00> : vector<2xf32>
    %4 = vector.multi_reduction <add>, %3, %cst [1] : vector<2x32xf32> to vector<2xf32>
    %5 = vector.shape_cast %4 : vector<2xf32> to vector<2x1xf32>
    %cst_2 = arith.constant 3.200000e+01 : f32
    %6 = vector.broadcast %cst_2 : f32 to vector<2x1xf32>
    %7 = arith.divf %5, %6 : vector<2x1xf32>
    %8 = vector.broadcast %7 : vector<2x1xf32> to vector<2x32xf32>
    %9 = arith.subf %3, %8 : vector<2x32xf32>
    %10 = arith.mulf %9, %9 : vector<2x32xf32>
    %cst_3 = arith.constant dense<0.000000e+00> : vector<2xf32>
    %11 = vector.multi_reduction <add>, %10, %cst_3 [1] : vector<2x32xf32> to vector<2xf32>
    %12 = vector.shape_cast %11 : vector<2xf32> to vector<2x1xf32>
    %cst_4 = arith.constant 3.200000e+01 : f32
    %13 = vector.broadcast %cst_4 : f32 to vector<2x1xf32>
    %14 = arith.divf %12, %13 : vector<2x1xf32>
    %cst_5 = arith.constant 9.99999996E-13 : f32
    %15 = vector.broadcast %cst_5 : f32 to vector<2x1xf32>
    %16 = arith.addf %14, %15 : vector<2x1xf32>
    %17 = math.rsqrt %16 : vector<2x1xf32>
    %18 = vector.broadcast %17 : vector<2x1xf32> to vector<2x32xf32>
    %19 = arith.mulf %9, %18 : vector<2x32xf32>
    %c0_6 = arith.constant 0 : index
    %c0_7 = arith.constant 0 : index
    %20 = vector.load %arg6[%c0_6, %c0_7] : memref<1x32xf32, #tpu.memory_space<vmem>>, vector<1x32xf32>
    %21 = vector.broadcast %20 : vector<1x32xf32> to vector<2x32xf32>
    %22 = arith.mulf %19, %21 : vector<2x32xf32>
    %c0_8 = arith.constant 0 : index
    %c0_9 = arith.constant 0 : index
    %23 = vector.load %arg7[%c0_8, %c0_9] : memref<1x32xf32, #tpu.memory_space<vmem>>, vector<1x32xf32>
    %24 = vector.broadcast %23 : vector<1x32xf32> to vector<2x32xf32>
    %25 = arith.addf %22, %24 : vector<2x32xf32>
    %c0_10 = arith.constant 0 : index
    %c0_11 = arith.constant 0 : index
    %26 = vector.load %arg9[%c0_10, %c0_11] : memref<2x128xf32, #tpu.memory_space<vmem>>, vector<2x128xf32>
    %27 = arith.truncf %25 : vector<2x32xf32> to vector<2x32xbf16>
    %c0_12 = arith.constant 0 : index
    %c0_13 = arith.constant 0 : index
    %28 = vector.load %arg4[%c0_12, %c0_13] : memref<32x128xbf16, #tpu.memory_space<vmem>>, vector<32x128xbf16>
    %cst_14 = arith.constant dense<0.000000e+00> : vector<2x128xf32>
    %29 = tpu.matmul %27, %28, %cst_14 {dimension_numbers = #tpu.dot_dimension_numbers<[1], [0], [0], [1], [0, 0, 1, 1], [], []>} : vector<2x32xbf16>, vector<32x128xbf16>, vector<2x128xf32> -> vector<2x128xf32>
    %30 = arith.addf %26, %29 : vector<2x128xf32>
    %c0_15 = arith.constant 0 : index
    %c0_16 = arith.constant 0 : index
    %31 = vector.load %arg9[%c0_15, %c0_16] : memref<2x128xf32, #tpu.memory_space<vmem>>, vector<2x128xf32>
    tpu.vector_store %arg9[%c0_15, %c0_16], %30 {strides = array<i32>} : memref<2x128xf32, #tpu.memory_space<vmem>>, vector<2x128xf32>,
    %c0_i32_17 = arith.constant 0 : i32
    %32 = arith.cmpi eq, %arg2, %c0_i32_17 : i32
    %33 = arith.extui %32 : i1 to i32
    %c0_i32_18 = arith.constant 0 : i32
    %34 = arith.cmpi ne, %33, %c0_i32_18 : i32
    scf.if %34 {
      %c0_19 = arith.constant 0 : index
      %c0_20 = arith.constant 0 : index
      %35 = vector.load %arg9[%c0_19, %c0_20] : memref<2x128xf32, #tpu.memory_space<vmem>>, vector<2x128xf32>
      %c0_21 = arith.constant 0 : index
      %c0_22 = arith.constant 0 : index
      %36 = vector.load %arg5[%c0_21, %c0_22] : memref<1x128xf32, #tpu.memory_space<vmem>>, vector<1x128xf32>
      %37 = vector.broadcast %36 : vector<1x128xf32> to vector<2x128xf32>
      %38 = arith.addf %35, %37 : vector<2x128xf32>
      %c0_23 = arith.constant 0 : index
      %c0_24 = arith.constant 0 : index
      %39 = vector.load %arg8[%c0_23, %c0_24] : memref<2x128xf32, #tpu.memory_space<vmem>>, vector<2x128xf32>
      tpu.vector_store %arg8[%c0_23, %c0_24], %38 {strides = array<i32>} : memref<2x128xf32, #tpu.memory_space<vmem>>, vector<2x128xf32>,
    } else {
    }
    return
  }
  func.func @transform_0(%arg0: i32, %arg1: i32, %arg2: i32) -> (i32, i32) {
    %c0_i32 = arith.constant 0 : i32
    return %arg0, %arg2 : i32, i32
  }
  func.func @transform_1(%arg0: i32, %arg1: i32, %arg2: i32) -> (i32, i32) {
    %c0_i32 = arith.constant 0 : i32
    return %arg2, %arg1 : i32, i32
  }
  func.func @transform_2(%arg0: i32, %arg1: i32, %arg2: i32) -> (i32, i32) {
    %c0_i32 = arith.constant 0 : i32
    %c0_i32_0 = arith.constant 0 : i32
    return %c0_i32, %arg1 : i32, i32
  }
  func.func @transform_3(%arg0: i32, %arg1: i32, %arg2: i32) -> (i32, i32) {
    %c0_i32 = arith.constant 0 : i32
    %c0_i32_0 = arith.constant 0 : i32
    %c0_i32_1 = arith.constant 0 : i32
    return %c0_i32, %c0_i32_0 : i32, i32
  }
  func.func @transform_4(%arg0: i32, %arg1: i32, %arg2: i32) -> (i32, i32) {
    %c0_i32 = arith.constant 0 : i32
    %c0_i32_0 = arith.constant 0 : i32
    %c0_i32_1 = arith.constant 0 : i32
    return %c0_i32, %c0_i32_0 : i32, i32
  }
  func.func @transform_5(%arg0: i32, %arg1: i32, %arg2: i32) -> (i32, i32) {
    %c0_i32 = arith.constant 0 : i32
    return %arg0, %arg1 : i32, i32
  }
}

</mosaic_0001>

<llo_original>
// kernel: vit_forward.13
$region0: #{vit_forward.13}
  #allocation0 [shape = 'u32[]', space=smem, size = 0x4, offset = 0x4, fixed_abs, tag = 'smem constant byte address 0x4 - core index']
  #allocation1 [shape = 'u32[144,128]{1,0:T(1,128)}', space=vmem, size = 0x12000, scoped, tag = 'internal scratch']
  #allocation2 [shape = 'f32[10,128]{1,0:T(8,128)}', space=vmem, size = 0x2000, scoped, tag = 'scratch operand']
  %s0 = inlined_call_operand.vmem [shape: f32[10,32], index: 0, kind: input, shape index: {}]
  %s1 = inlined_call_operand.vmem [shape: bf16[32,128], index: 1, kind: input, shape index: {}]
  %s2 = inlined_call_operand.vmem [shape: f32[1,128], index: 2, kind: input, shape index: {}]
  %s3 = inlined_call_operand.vmem [shape: f32[1,32], index: 3, kind: input, shape index: {}]
  %s4 = inlined_call_operand.vmem [shape: f32[1,32], index: 4, kind: input, shape index: {}]
  %s5 = inlined_call_operand.vmem [shape: f32[10,128], index: 5, kind: output, shape index: {}]
  %s6 = sld [smem:[#allocation0]]
  $region38: #{vit_forward.13} parent=0
    _
  %s8 = ssub.s32 1, %s6
  %s9 = scalar_select 0, %s8, %s6
  // Predicated region
  $region2: #{vit_forward.13} parent=0 // pred_check
    _
  $region3: #{vit_forward.13} parent=0 // pred_check_branch
    %11 = sbr.rel (0) target = $region5
  $region4: #{vit_forward.13} parent=0 // pred_region
    _
  $region5: #{vit_forward.13} parent=0 // pred_fallthru
    _
  // Predicated region
  $region6: #{vit_forward.13} parent=0 // pred_check
    _
  $region7: #{vit_forward.13} parent=0 // pred_check_branch
    %13 = sbr.rel (0) target = $region9
  $region8: #{vit_forward.13} parent=0 // pred_region
    _
  $region9: #{vit_forward.13} parent=0 // pred_fallthru
    _
  // Predicated region
  $region10: #{vit_forward.13} parent=0 // pred_check
    _
  $region11: #{vit_forward.13} parent=0 // pred_check_branch
    %15 = sbr.rel (0) target = $region13
  $region12: #{vit_forward.13} parent=0 // pred_region
    _
  $region13: #{vit_forward.13} parent=0 // pred_fallthru
    _
  // Predicated region
  $region14: #{vit_forward.13} parent=0 // pred_check
    _
  $region15: #{vit_forward.13} parent=0 // pred_check_branch
    %17 = sbr.rel (0) target = $region17
  $region16: #{vit_forward.13} parent=0 // pred_region
    _
  $region17: #{vit_forward.13} parent=0 // pred_fallthru
    _
  // Predicated region
  $region18: #{vit_forward.13} parent=0 // pred_check
    _
  $region19: #{vit_forward.13} parent=0 // pred_check_branch
    %19 = sbr.rel (0) target = $region21
  $region20: #{vit_forward.13} parent=0 // pred_region
    _
  $region21: #{vit_forward.13} parent=0 // pred_fallthru
    _
  %p21 = scmp.eq.s32.totalorder 0, 0
  // Predicated region
  $region22: #{vit_forward.13} parent=0 // pred_check
    %p22 = pneg %p21
  $region23: #{vit_forward.13} parent=0 // pred_check_branch
    %24 = sbr.rel (%p22) target = $region25
  $region24: #{vit_forward.13} parent=0 // pred_region
    %25 = vst [vmem:[#allocation2] sm:$0xff] 0.0
    %26 = vst [vmem:[#allocation2 + $0x8] sm:$0x3] 0.0
  $region25: #{vit_forward.13} parent=0 // pred_fallthru
    _
  %v27 = vld [vmem:[%s0] sm:$0xff]
  %v28 = vld [vmem:[%s0 + $0x8] sm:$0x3]
  %vm29 = vcmask 261120
  %v30 = vsel %vm29, %v27, 0.0
  %31 = vadd.xlane.f32.xlu0 %v30
  %v32 = vpop.xlane.xlu0 %31
  %vm33 = vcmask 254976
  %v34 = vsel %vm33, %v28, 0.0
  %35 = vadd.xlane.f32.xlu0 %v34
  %v36 = vpop.xlane.xlu0 %35
  %v37 = vrcp.pop 32.0
  %v38 = vmul.f32 %v32, %v37
  %v39 = vmul.f32 %v36, %v37
  %v40 = vsub.f32 %v27, %v38
  %v41 = vsub.f32 %v28, %v39
  %v42 = vmul.f32 %v40, %v40
  %v43 = vmul.f32 %v41, %v41
  %v44 = vsel %vm29, %v42, 0.0
  %45 = vadd.xlane.f32.xlu0 %v44
  %v46 = vpop.xlane.xlu0 %45
  %v47 = vsel %vm33, %v43, 0.0
  %48 = vadd.xlane.f32.xlu0 %v47
  %v49 = vpop.xlane.xlu0 %48
  %v50 = vmul.f32 %v46, %v37
  %v51 = vmul.f32 %v49, %v37
  %v52 = vadd.f32 %v50, 1e-12
  %v53 = vadd.f32 %v51, 1e-12
  %v54 = vrsqrt.pop %v52
  %v55 = vrsqrt.pop %v53
  %v56 = vmul.f32 %v40, %v54
  %v57 = vmul.f32 %v41, %v55
  %v58 = vld [vmem:[%s3] sm:$0x1]
  %v60 = vlaneseq
  %v61 = vshrl.u32 %v60, 7
  %v62 = vsub.s32 0, %v61
  %v63 = vrot.slane %v58, %v62
  %v65 = vmul.f32 %v56, %v63
  %v66 = vmul.f32 %v57, %v63
  %v67 = vld [vmem:[%s4] sm:$0x1]
  %v69 = vlaneseq
  %v70 = vshrl.u32 %v69, 7
  %v71 = vsub.s32 0, %v70
  %v72 = vrot.slane %v67, %v71
  %v74 = vadd.f32 %v65, %v72
  %v75 = vadd.f32 %v66, %v72
  %v76 = vld [vmem:[#allocation2] sm:$0xff]
  %v77 = vld [vmem:[#allocation2 + $0x8] sm:$0x3]
  %v78 = vpack.c.bf16 %v75, %v74
  %v79 = vld [vmem:[%s1] sm:$0xf]
  %v80 = vld [vmem:[%s1 + $0x4] sm:$0xf]
  %v81 = vld [vmem:[%s1 + $0x8] sm:$0xf]
  %v82 = vld [vmem:[%s1 + $0xc] sm:$0xf]
  %v87 = vunpack.c.l.b16 %v79
  %v88 = vunpack.c.l.b16 %v80
  %v89 = vunpack.c.l.b16 %v81
  %v90 = vunpack.c.l.b16 %v82
  %v91 = vpack.c.b16 %v88, %v87
  %v92 = vpack.c.b16 %v90, %v89
  %v96 = vsel %vm29, %v78, 0
  %98 = vmatprep.subr.bf16.mxu0 0
  %99 = vmatpush1.bf16.msra.mxu0 0
  %100 = vmatprep.subr.bf16.mxu0 0
  %101 = vmatpush1.bf16.msra.mxu0 0
  %102 = vmatprep.subr.bf16.mxu0 0
  %103 = vmatpush1.bf16.msra.mxu0 0
  %104 = vmatprep.subr.bf16.mxu0 0
  %105 = vmatpush1.bf16.msra.mxu0 0
  %106 = vmatprep.subr.bf16.mxu0 0
  %107 = vmatpush1.bf16.msra.mxu0 0
  %108 = vmatprep.subr.bf16.mxu0 0
  %109 = vmatpush1.bf16.msra.mxu0 0
  %110 = vmatprep.subr.bf16.mxu0 0
  %111 = vmatpush1.bf16.msra.mxu0 %v92
  %112 = vmatprep.subr.bf16.mxu0 0
  %113 = vmatpush1.bf16.msra.mxu0 %v91
  %114 = vmatprep.subr.bf16.mxu0 0
  %115 = vmatpush2.bf16.msra.mxu0 0
  %116 = vmatprep.subr.bf16.mxu0 0
  %117 = vmatpush2.bf16.msra.mxu0 0
  %118 = vmatprep.subr.bf16.mxu0 0
  %119 = vmatpush2.bf16.msra.mxu0 0
  %120 = vmatprep.subr.bf16.mxu0 0
  %121 = vmatpush2.bf16.msra.mxu0 0
  %122 = vmatprep.subr.bf16.mxu0 0
  %123 = vmatpush2.bf16.msra.mxu0 0
  %124 = vmatprep.subr.bf16.mxu0 0
  %125 = vmatpush2.bf16.msra.mxu0 0
  %126 = vmatprep.subr.bf16.mxu0 0
  %127 = vmatpush2.bf16.msra.mxu0 0
  %128 = vmatprep.subr.bf16.mxu0 0
  %129 = vmatpush2.bf16.msra.mxu0 0
  %130 = vmatprep.mubr.bf16.mxu0 0
  %131 = vmatmul.mubr.bf16.gmra.mxu0 %v96
  %v132 = vpop.f32.mrf.mxu0
  %v133 = vadd.f32 0.0, %v132
  %v134 = vpop.f32.mrf.mxu0
  %v135 = vpop.f32.mrf.mxu0
  %v136 = vadd.f32 0.0, %v135
  %v137 = vpop.f32.mrf.mxu0
  %138 = vdwg.mxu0
  %v139 = vadd.f32 %v76, %v133
  %v140 = vadd.f32 %v77, %v136
  %141 = vst [vmem:[#allocation2] sm:$0xff] %v139
  %142 = vst [vmem:[#allocation2 + $0x8] sm:$0x3] %v140
  // Predicated region
  $region26: #{vit_forward.13} parent=0 // pred_check
    %p143 = pneg %p21
  $region27: #{vit_forward.13} parent=0 // pred_check_branch
    %145 = sbr.rel (%p143) target = $region29
  $region28: #{vit_forward.13} parent=0 // pred_region
    %v146 = vld [vmem:[#allocation2] sm:$0xff]
    %v147 = vld [vmem:[#allocation2 + $0x8] sm:$0x3]
    %v148 = vld [vmem:[%s2] sm:$0x1]
    %v150 = vlaneseq
    %v151 = vshrl.u32 %v150, 7
    %v152 = vsub.s32 0, %v151
    %v153 = vrot.slane %v148, %v152
    %v155 = vadd.f32 %v146, %v153
    %v156 = vadd.f32 %v147, %v153
    %157 = vst [vmem:[%s5] sm:$0xff] %v155
    %158 = vst [vmem:[%s5 + $0x8] sm:$0x3] %v156
  $region29: #{vit_forward.13} parent=0 // pred_fallthru
    _
  // Predicated region
  $region30: #{vit_forward.13} parent=0 // pred_check
    _
  $region31: #{vit_forward.13} parent=0 // pred_check_branch
    %160 = sbr.rel (0) target = $region33
  $region32: #{vit_forward.13} parent=0 // pred_region
    _
  $region33: #{vit_forward.13} parent=0 // pred_fallthru
    _
  // Predicated region
  $region34: #{vit_forward.13} parent=0 // pred_check
    _
  $region35: #{vit_forward.13} parent=0 // pred_check_branch
    %162 = sbr.rel (0) target = $region37
  $region36: #{vit_forward.13} parent=0 // pred_region
    _
  $region37: #{vit_forward.13} parent=0 // pred_fallthru
    _

// kernel: vit_forward.12
$region0: #{vit_forward.12}
  #allocation0 [shape = 'u32[]', space=smem, size = 0x4, offset = 0x4, fixed_abs, tag = 'smem constant byte address 0x4 - core index']
  #allocation1 [shape = 'u32[144,128]{1,0:T(1,128)}', space=vmem, size = 0x12000, scoped, tag = 'internal scratch']
  #allocation2 [shape = 'f32[8,128]{1,0:T(8,128)}', space=vmem, size = 0x1000, scoped, tag = 'scratch operand']
  %s0 = inlined_call_operand.vmem [shape: f32[8,192], index: 0, kind: input, shape index: {}]
  %s1 = inlined_call_operand.vmem [shape: bf16[192,128], index: 1, kind: input, shape index: {}]
  %s2 = inlined_call_operand.vmem [shape: f32[1,128], index: 2, kind: input, shape index: {}]
  %s3 = inlined_call_operand.vmem [shape: f32[8,128], index: 3, kind: output, shape index: {}]
  %s4 = sld [smem:[#allocation0]]
  $region30: #{vit_forward.12} parent=0
    _
  %s6 = ssub.s32 1, %s4
  %s7 = scalar_select 0, %s6, %s4
  // Predicated region
  $region2: #{vit_forward.12} parent=0 // pred_check
    _
  $region3: #{vit_forward.12} parent=0 // pred_check_branch
    %9 = sbr.rel (0) target = $region5
  $region4: #{vit_forward.12} parent=0 // pred_region
    _
  $region5: #{vit_forward.12} parent=0 // pred_fallthru
    _
  // Predicated region
  $region6: #{vit_forward.12} parent=0 // pred_check
    _
  $region7: #{vit_forward.12} parent=0 // pred_check_branch
    %11 = sbr.rel (0) target = $region9
  $region8: #{vit_forward.12} parent=0 // pred_region
    _
  $region9: #{vit_forward.12} parent=0 // pred_fallthru
    _
  // Predicated region
  $region10: #{vit_forward.12} parent=0 // pred_check
    _
  $region11: #{vit_forward.12} parent=0 // pred_check_branch
    %13 = sbr.rel (0) target = $region13
  $region12: #{vit_forward.12} parent=0 // pred_region
    _
  $region13: #{vit_forward.12} parent=0 // pred_fallthru
    _
  %p15 = scmp.eq.s32.totalorder 0, 0
  // Predicated region
  $region14: #{vit_forward.12} parent=0 // pred_check
    %p16 = pneg %p15
  $region15: #{vit_forward.12} parent=0 // pred_check_branch
    %18 = sbr.rel (%p16) target = $region17
  $region16: #{vit_forward.12} parent=0 // pred_region
    %19 = vst [vmem:[#allocation2] sm:$0xff] 0.0
  $region17: #{vit_forward.12} parent=0 // pred_fallthru
    _
  %v20 = vld [vmem:[%s0] sm:$0xff]
  %v21 = vld [vmem:[%s0 + $0x8] sm:$0xff]
  %v22 = vld [vmem:[#allocation2] sm:$0xff]
  %v23 = vpack.c.bf16 %v20, %v20
  %v24 = vpack.c.bf16 %v21, %v21
  %v25 = vld [vmem:[%s1] sm:$0xf]
  %v26 = vld [vmem:[%s1 + $0x4] sm:$0xf]
  %v27 = vld [vmem:[%s1 + $0x8] sm:$0xf]
  %v28 = vld [vmem:[%s1 + $0xc] sm:$0xf]
  %v29 = vld [vmem:[%s1 + $0x10] sm:$0xf]
  %v30 = vld [vmem:[%s1 + $0x14] sm:$0xf]
  %v31 = vld [vmem:[%s1 + $0x18] sm:$0xf]
  %v32 = vld [vmem:[%s1 + $0x1c] sm:$0xf]
  %v33 = vld [vmem:[%s1 + $0x20] sm:$0xf]
  %v34 = vld [vmem:[%s1 + $0x24] sm:$0xf]
  %v35 = vld [vmem:[%s1 + $0x28] sm:$0xf]
  %v36 = vld [vmem:[%s1 + $0x2c] sm:$0xf]
  %v37 = vld [vmem:[%s1 + $0x30] sm:$0xf]
  %v38 = vld [vmem:[%s1 + $0x34] sm:$0xf]
  %v39 = vld [vmem:[%s1 + $0x38] sm:$0xf]
  %v40 = vld [vmem:[%s1 + $0x3c] sm:$0xf]
  %v41 = vld [vmem:[%s1 + $0x40] sm:$0xf]
  %v42 = vld [vmem:[%s1 + $0x44] sm:$0xf]
  %v43 = vld [vmem:[%s1 + $0x48] sm:$0xf]
  %v44 = vld [vmem:[%s1 + $0x4c] sm:$0xf]
  %v45 = vld [vmem:[%s1 + $0x50] sm:$0xf]
  %v46 = vld [vmem:[%s1 + $0x54] sm:$0xf]
  %v47 = vld [vmem:[%s1 + $0x58] sm:$0xf]
  %v48 = vld [vmem:[%s1 + $0x5c] sm:$0xf]
  %v73 = vunpack.c.l.b16 %v25
  %v74 = vunpack.c.l.b16 %v26
  %v75 = vunpack.c.l.b16 %v27
  %v76 = vunpack.c.l.b16 %v28
  %v77 = vunpack.c.l.b16 %v29
  %v78 = vunpack.c.l.b16 %v30
  %v79 = vunpack.c.l.b16 %v31
  %v80 = vunpack.c.l.b16 %v32
  %v81 = vunpack.c.l.b16 %v33
  %v82 = vunpack.c.l.b16 %v34
  %v83 = vunpack.c.l.b16 %v35
  %v84 = vunpack.c.l.b16 %v36
  %v85 = vunpack.c.l.b16 %v37
  %v86 = vunpack.c.l.b16 %v38
  %v87 = vunpack.c.l.b16 %v39
  %v88 = vunpack.c.l.b16 %v40
  %v89 = vunpack.c.l.b16 %v41
  %v90 = vunpack.c.l.b16 %v42
  %v91 = vunpack.c.l.b16 %v43
  %v92 = vunpack.c.l.b16 %v44
  %v93 = vunpack.c.l.b16 %v45
  %v94 = vunpack.c.l.b16 %v46
  %v95 = vunpack.c.l.b16 %v47
  %v96 = vunpack.c.l.b16 %v48
  %v97 = vpack.c.b16 %v74, %v73
  %v98 = vpack.c.b16 %v76, %v75
  %v99 = vpack.c.b16 %v78, %v77
  %v100 = vpack.c.b16 %v80, %v79
  %v101 = vpack.c.b16 %v82, %v81
  %v102 = vpack.c.b16 %v84, %v83
  %v103 = vpack.c.b16 %v86, %v85
  %v104 = vpack.c.b16 %v88, %v87
  %v105 = vpack.c.b16 %v90, %v89
  %v106 = vpack.c.b16 %v92, %v91
  %v107 = vpack.c.b16 %v94, %v93
  %v108 = vpack.c.b16 %v96, %v95
  %vm121 = vcmask 523264
  %v123 = vsel %vm121, %v24, 0
  %125 = vmatprep.subr.bf16.mxu0 0
  %126 = vmatpush1.bf16.msra.mxu0 %v104
  %127 = vmatprep.subr.bf16.mxu0 0
  %128 = vmatpush1.bf16.msra.mxu0 %v103
  %129 = vmatprep.subr.bf16.mxu0 0
  %130 = vmatpush1.bf16.msra.mxu0 %v102
  %131 = vmatprep.subr.bf16.mxu0 0
  %132 = vmatpush1.bf16.msra.mxu0 %v101
  %133 = vmatprep.subr.bf16.mxu0 0
  %134 = vmatpush1.bf16.msra.mxu0 %v100
  %135 = vmatprep.subr.bf16.mxu0 0
  %136 = vmatpush1.bf16.msra.mxu0 %v99
  %137 = vmatprep.subr.bf16.mxu0 0
  %138 = vmatpush1.bf16.msra.mxu0 %v98
  %139 = vmatprep.subr.bf16.mxu0 0
  %140 = vmatpush1.bf16.msra.mxu0 %v97
  %141 = vmatprep.subr.bf16.mxu0 0
  %142 = vmatpush2.bf16.msra.mxu0 0
  %143 = vmatprep.subr.bf16.mxu0 0
  %144 = vmatpush2.bf16.msra.mxu0 0
  %145 = vmatprep.subr.bf16.mxu0 0
  %146 = vmatpush2.bf16.msra.mxu0 0
  %147 = vmatprep.subr.bf16.mxu0 0
  %148 = vmatpush2.bf16.msra.mxu0 0
  %149 = vmatprep.subr.bf16.mxu0 0
  %150 = vmatpush2.bf16.msra.mxu0 %v108
  %151 = vmatprep.subr.bf16.mxu0 0
  %152 = vmatpush2.bf16.msra.mxu0 %v107
  %153 = vmatprep.subr.bf16.mxu0 0
  %154 = vmatpush2.bf16.msra.mxu0 %v106
  %155 = vmatprep.subr.bf16.mxu0 0
  %156 = vmatpush2.bf16.msra.mxu0 %v105
  %157 = vmatprep.mubr.bf16.mxu0 %v123
  %158 = vmatmul.mubr.bf16.gmra.mxu0 %v23
  %v159 = vpop.f32.mrf.mxu0
  %v160 = vadd.f32 0.0, %v159
  %v161 = vpop.f32.mrf.mxu0
  %v162 = vpop.f32.mrf.mxu0
  %v163 = vpop.f32.mrf.mxu0
  %164 = vdwg.mxu0
  %v165 = vadd.f32 %v22, %v160
  %166 = vst [vmem:[#allocation2] sm:$0xff] %v165
  // Predicated region
  $region18: #{vit_forward.12} parent=0 // pred_check
    %p167 = pneg %p15
  $region19: #{vit_forward.12} parent=0 // pred_check_branch
    %169 = sbr.rel (%p167) target = $region21
  $region20: #{vit_forward.12} parent=0 // pred_region
    %v170 = vld [vmem:[#allocation2] sm:$0xff]
    %v171 = vld [vmem:[%s2] sm:$0x1]
    %v173 = vlaneseq
    %v174 = vshrl.u32 %v173, 7
    %v175 = vsub.s32 0, %v174
    %v176 = vrot.slane %v171, %v175
    %v178 = vadd.f32 %v170, %v176
    %179 = vst [vmem:[%s3] sm:$0xff] %v178
  $region21: #{vit_forward.12} parent=0 // pred_fallthru
    _
  // Predicated region
  $region22: #{vit_forward.12} parent=0 // pred_check
    _
  $region23: #{vit_forward.12} parent=0 // pred_check_branch
    %181 = sbr.rel (0) target = $region25
  $region24: #{vit_forward.12} parent=0 // pred_region
    _
  $region25: #{vit_forward.12} parent=0 // pred_fallthru
    _
  // Predicated region
  $region26: #{vit_forward.12} parent=0 // pred_check
    _
  $region27: #{vit_forward.12} parent=0 // pred_check_branch
    %183 = sbr.rel (0) target = $region29
  $region28: #{vit_forward.12} parent=0 // pred_region
    _
  $region29: #{vit_forward.12} parent=0 // pred_fallthru
    _

// kernel: vit_forward.14
$region0: #{vit_forward.14}
  #allocation0 [shape = 'u32[]', space=smem, size = 0x4, offset = 0x4, fixed_abs, tag = 'smem constant byte address 0x4 - core index']
  #allocation1 [shape = 'u32[144,128]{1,0:T(1,128)}', space=vmem, size = 0x12000, scoped, tag = 'internal scratch']
  %s0 = inlined_call_operand.vmem [shape: f32[2,4,5,8], index: 0, kind: input, shape index: {}]
  %s1 = inlined_call_operand.vmem [shape: f32[2,4,5,8], index: 1, kind: input, shape index: {}]
  %s2 = inlined_call_operand.vmem [shape: f32[2,4,5,8], index: 2, kind: input, shape index: {}]
  %s3 = inlined_call_operand.vmem [shape: f32[2,4,5,8], index: 3, kind: output, shape index: {}]
  %s4 = sld [smem:[#allocation0]]
  $region45: #{vit_forward.14} parent=0
    _
  %s6 = ssub.s32 1, %s4
  %s7 = scalar_select 0, %s6, %s4
  loop: start=0, step=1, limit=4
  $region2: #{vit_forward.14} parent=0 // loop_pre_header
    _
  $region3: #{vit_forward.14} parent=0 // loop_header
    %s9 = sphi 0, %s13
    %p10 = scmp.ge.s32.totalorder %s9, 4
    %s19 = sphi 0, %s21
    %s22 = sphi 0, %s19
    %s23 = sphi 0, %s22
    %s39 = sphi 0, %s23
    %s45 = sphi 0, %s47
    %s48 = sphi 0, %s45
    %s49 = sphi 0, %s48
    %s65 = sphi 0, %s49
    %s71 = sphi 0, %s73
    %s74 = sphi 0, %s71
    %s75 = sphi 0, %s74
    %s91 = sphi 0, %s75
    %s97 = sphi 0, %s99
    %s100 = sphi 0, %s97
    %s101 = sphi 0, %s100
    %s117 = sphi 0, %s101
  $region4: #{vit_forward.14} parent=0 // loop_header_branch
    %12 = sbr.rel (%p10) target = $region8
  $region5: #{vit_forward.14} parent=0 // loop_body
    %s14 = ssub.s32 %s9, 1
    %s15 = ssub.s32 %s9, 2
    %s16 = sadd.s32 %s9, 1
    %s17 = ssub.s32 %s9, %s16
    %p18 = scmp.eq.s32.totalorder %s17, 0
    %s20 = sadd.s32 %s19, 1
    %s21 = scalar_select %p18, %s19, %s20
    %p24 = pneg %p18
    %p25 = scmp.eq.s32.totalorder %s9, 1
    %p26 = por %p24, %p25
    %p27 = scmp.ne.s32.totalorder %s19, %s22
    %p28 = scmp.eq.s32.totalorder %s9, 0
    %p29 = por %p27, %p28
    %p30 = scmp.ne.s32.totalorder %s19, %s22
    %p31 = scmp.eq.s32.totalorder %s14, 1
    %p32 = por %p30, %p31
    %p33 = scmp.ne.s32.totalorder %s22, %s23
    %p34 = scmp.eq.s32.totalorder %s14, 0
    %p35 = por %p33, %p34
    %p36 = scmp.ne.s32.totalorder %s22, %s23
    %p37 = scmp.eq.s32.totalorder %s15, 1
    %p38 = por %p36, %p37
    %p40 = scmp.ne.s32.totalorder %s23, %s39
    %p41 = scmp.eq.s32.totalorder %s15, 0
    %p42 = por %p40, %p41
    %s43 = ssub.s32 %s9, %s16
    %p44 = scmp.eq.s32.totalorder %s43, 0
    %s46 = sadd.s32 %s45, 1
    %s47 = scalar_select %p44, %s45, %s46
    %p50 = pneg %p44
    %p51 = scmp.eq.s32.totalorder %s9, 1
    %p52 = por %p50, %p51
    %p53 = scmp.ne.s32.totalorder %s45, %s48
    %p54 = scmp.eq.s32.totalorder %s9, 0
    %p55 = por %p53, %p54
    %p56 = scmp.ne.s32.totalorder %s45, %s48
    %p57 = scmp.eq.s32.totalorder %s14, 1
    %p58 = por %p56, %p57
    %p59 = scmp.ne.s32.totalorder %s48, %s49
    %p60 = scmp.eq.s32.totalorder %s14, 0
    %p61 = por %p59, %p60
    %p62 = scmp.ne.s32.totalorder %s48, %s49
    %p63 = scmp.eq.s32.totalorder %s15, 1
    %p64 = por %p62, %p63
    %p66 = scmp.ne.s32.totalorder %s49, %s65
    %p67 = scmp.eq.s32.totalorder %s15, 0
    %p68 = por %p66, %p67
    %s69 = ssub.s32 %s9, %s16
    %p70 = scmp.eq.s32.totalorder %s69, 0
    %s72 = sadd.s32 %s71, 1
    %s73 = scalar_select %p70, %s71, %s72
    %p76 = pneg %p70
    %p77 = scmp.eq.s32.totalorder %s9, 1
    %p78 = por %p76, %p77
    %p79 = scmp.ne.s32.totalorder %s71, %s74
    %p80 = scmp.eq.s32.totalorder %s9, 0
    %p81 = por %p79, %p80
    %p82 = scmp.ne.s32.totalorder %s71, %s74
    %p83 = scmp.eq.s32.totalorder %s14, 1
    %p84 = por %p82, %p83
    %p85 = scmp.ne.s32.totalorder %s74, %s75
    %p86 = scmp.eq.s32.totalorder %s14, 0
    %p87 = por %p85, %p86
    %p88 = scmp.ne.s32.totalorder %s74, %s75
    %p89 = scmp.eq.s32.totalorder %s15, 1
    %p90 = por %p88, %p89
    %p92 = scmp.ne.s32.totalorder %s75, %s91
    %p93 = scmp.eq.s32.totalorder %s15, 0
    %p94 = por %p92, %p93
    %s95 = ssub.s32 %s9, %s16
    %p96 = scmp.eq.s32.totalorder %s95, 0
    %s98 = sadd.s32 %s97, 1
    %s99 = scalar_select %p96, %s97, %s98
    %p102 = pneg %p96
    %p103 = scmp.eq.s32.totalorder %s9, 1
    %p104 = por %p102, %p103
    %p105 = scmp.ne.s32.totalorder %s97, %s100
    %p106 = scmp.eq.s32.totalorder %s9, 0
    %p107 = por %p105, %p106
    %p108 = scmp.ne.s32.totalorder %s97, %s100
    %p109 = scmp.eq.s32.totalorder %s14, 1
    %p110 = por %p108, %p109
    %p111 = scmp.ne.s32.totalorder %s100, %s101
    %p112 = scmp.eq.s32.totalorder %s14, 0
    %p113 = por %p111, %p112
    %p114 = scmp.ne.s32.totalorder %s100, %s101
    %p115 = scmp.eq.s32.totalorder %s15, 1
    %p116 = por %p114, %p115
    %p118 = scmp.ne.s32.totalorder %s101, %s117
    %p119 = scmp.eq.s32.totalorder %s15, 0
    %p120 = por %p118, %p119
    %p121 = scmp.le.s32.totalorder 1, %s9
    %p122 = scmp.lt.s32.totalorder %s9, 3
    %p123 = pnand %p121, %p122
    %p124 = pneg %p123
    // Predicated region
    $region9: #{vit_forward.14} parent=5 // pred_check
      _
    $region10: #{vit_forward.14} parent=5 // pred_check_branch
      %126 = sbr.rel (%p123) target = $region12
    $region11: #{vit_forward.14} parent=5 // pred_region
      %s127 = ssub.s32 %s9, 1
    $region12: #{vit_forward.14} parent=5 // pred_fallthru
      _
    %p128 = scmp.lt.s32.totalorder %s9, 2
    // Predicated region
    $region13: #{vit_forward.14} parent=5 // pred_check
      %p129 = pneg %p128
    $region14: #{vit_forward.14} parent=5 // pred_check_branch
      %131 = sbr.rel (%p129) target = $region16
    $region15: #{vit_forward.14} parent=5 // pred_region
      // Predicated region
      $region17: #{vit_forward.14} parent=15 // pred_check
        %p132 = pneg %p29
      $region18: #{vit_forward.14} parent=15 // pred_check_branch
        %134 = sbr.rel (%p132) target = $region20
      $region19: #{vit_forward.14} parent=15 // pred_region
        %p135 = scmp.lt.s32.totalorder %s9, 1
        %s136 = scalar_select %p135, %s9, 1
        %s137 = smul.addr %s136, 4
        %s138 = smul.addr %s137, 8
        %s139 = scalar_lea.vmem %s0, %s138
      $region20: #{vit_forward.14} parent=15 // pred_fallthru
        _
      // Predicated region
      $region21: #{vit_forward.14} parent=15 // pred_check
        %p140 = pneg %p55
      $region22: #{vit_forward.14} parent=15 // pred_check_branch
        %142 = sbr.rel (%p140) target = $region24
      $region23: #{vit_forward.14} parent=15 // pred_region
        %p143 = scmp.lt.s32.totalorder %s9, 1
        %s144 = scalar_select %p143, %s9, 1
        %s145 = smul.addr %s144, 4
        %s146 = smul.addr %s145, 8
        %s147 = scalar_lea.vmem %s1, %s146
      $region24: #{vit_forward.14} parent=15 // pred_fallthru
        _
      // Predicated region
      $region25: #{vit_forward.14} parent=15 // pred_check
        %p148 = pneg %p81
      $region26: #{vit_forward.14} parent=15 // pred_check_branch
        %150 = sbr.rel (%p148) target = $region28
      $region27: #{vit_forward.14} parent=15 // pred_region
        %p151 = scmp.lt.s32.totalorder %s9, 1
        %s152 = scalar_select %p151, %s9, 1
        %s153 = smul.addr %s152, 4
        %s154 = smul.addr %s153, 8
        %s155 = scalar_lea.vmem %s2, %s154
      $region28: #{vit_forward.14} parent=15 // pred_fallthru
        _
    $region16: #{vit_forward.14} parent=5 // pred_fallthru
      _
    %p156 = scmp.le.s32.totalorder 1, %s9
    %p157 = scmp.lt.s32.totalorder %s9, 3
    %p158 = pnand %p156, %p157
    %p159 = pneg %p158
    // Predicated region
    $region29: #{vit_forward.14} parent=5 // pred_check
      _
    $region30: #{vit_forward.14} parent=5 // pred_check_branch
      %161 = sbr.rel (%p158) target = $region32
    $region31: #{vit_forward.14} parent=5 // pred_region
      %s162 = ssub.s32 %s9, 1
      %p163 = scmp.lt.s32.totalorder %s14, 1
      %s164 = scalar_select %p163, %s14, 1
      %s165 = smul.addr %s164, 4
      %s166 = smul.addr %s165, 8
      %s167 = scalar_lea.vmem %s0, %s166
      %p168 = pneg %p35
      %p169 = pneg %p32
      %p170 = scmp.lt.s32.totalorder %s14, 1
      %s171 = scalar_select %p170, %s14, 1
      %s172 = smul.addr %s171, 4
      %s173 = smul.addr %s172, 8
      %s174 = scalar_lea.vmem %s1, %s173
      %p175 = pneg %p61
      %p176 = pneg %p58
      %p177 = scmp.lt.s32.totalorder %s14, 1
      %s178 = scalar_select %p177, %s14, 1
      %s179 = smul.addr %s178, 4
      %s180 = smul.addr %s179, 8
      %s181 = scalar_lea.vmem %s2, %s180
      %p182 = pneg %p87
      %p183 = pneg %p84
      %p184 = pneg %p113
      %p185 = pneg %p110
      %p186 = scmp.lt.s32.totalorder %s14, 1
      %s187 = scalar_select %p186, %s14, 1
      %s188 = smul.addr %s187, 4
      %s189 = smul.addr %s188, 8
      %s190 = scalar_lea.vmem %s3, %s189
      %p191 = scmp.lt.s32.totalorder %s14, 1
      %s192 = scalar_select %p191, %s14, 1
      %s193 = smul.addr %s192, 4
      %s194 = smul.addr %s193, 8
      %s195 = scalar_lea.vmem %s0, %s194
      %p196 = scmp.lt.s32.totalorder %s14, 1
      %s197 = scalar_select %p196, %s14, 1
      %s198 = smul.addr %s197, 4
      %s199 = smul.addr %s198, 8
      %s200 = scalar_lea.vmem %s1, %s199
      %p201 = scmp.lt.s32.totalorder %s14, 1
      %s202 = scalar_select %p201, %s14, 1
      %s203 = smul.addr %s202, 4
      %s204 = smul.addr %s203, 8
      %s205 = scalar_lea.vmem %s2, %s204
      %p206 = scmp.lt.s32.totalorder %s14, 1
      %s207 = scalar_select %p206, %s14, 1
      %s208 = smul.addr %s207, 4
      %s209 = smul.addr %s208, 8
      %s210 = scalar_lea.vmem %s3, %s209
      %v212 = vld [vmem:[%s195] sm:$0x1f]
      %v213 = vld [vmem:[%s195 + $0x8] sm:$0x1f]
      %v214 = vld [vmem:[%s195 + $0x10] sm:$0x1f]
      %v215 = vld [vmem:[%s195 + $0x18] sm:$0x1f]
      %v216 = vmul.f32 %v212, 0.35355338
      %v217 = vmul.f32 %v213, 0.35355338
      %v218 = vmul.f32 %v214, 0.35355338
      %v219 = vmul.f32 %v215, 0.35355338
      %v220 = vpack.c.bf16 %v216, %v216
      %v221 = vpack.c.bf16 %v217, %v217
      %v222 = vpack.c.bf16 %v218, %v218
      %v223 = vpack.c.bf16 %v219, %v219
      %v224 = vld [vmem:[%s200] sm:$0x1f]
      %v225 = vld [vmem:[%s200 + $0x8] sm:$0x1f]
      %v226 = vld [vmem:[%s200 + $0x10] sm:$0x1f]
      %v227 = vld [vmem:[%s200 + $0x18] sm:$0x1f]
      %v228 = vpack.c.bf16 %v224, %v224
      %v229 = vpack.c.bf16 %v225, %v225
      %v230 = vpack.c.bf16 %v226, %v226
      %v231 = vpack.c.bf16 %v227, %v227
      %v232 = vld [vmem:[%s205] sm:$0x1f]
      %v233 = vld [vmem:[%s205 + $0x8] sm:$0x1f]
      %v234 = vld [vmem:[%s205 + $0x10] sm:$0x1f]
      %v235 = vld [vmem:[%s205 + $0x18] sm:$0x1f]
      %v236 = vpack.c.bf16 %v232, %v232
      %v237 = vpack.c.bf16 %v233, %v233
      %v238 = vpack.c.bf16 %v234, %v234
      %v239 = vpack.c.bf16 %v235, %v235
      %vm240 = vcmask 64512
      %v242 = vsel %vm240, %v220, 0
      %v245 = vsel %vm240, %v228, 0
      %247 = vmatprep.subr.bf16.mxu0 0
      %248 = vmatpush1.bf16.xpose.msra.mxu0 0
      %249 = vmatprep.subr.bf16.mxu0 0
      %250 = vmatpush1.bf16.xpose.msra.mxu0 0
      %251 = vmatprep.subr.bf16.mxu0 0
      %252 = vmatpush1.bf16.xpose.msra.mxu0 0
      %253 = vmatprep.subr.bf16.mxu0 0
      %254 = vmatpush1.bf16.xpose.msra.mxu0 0
      %255 = vmatprep.subr.bf16.mxu0 0
      %256 = vmatpush1.bf16.xpose.msra.mxu0 0
      %257 = vmatprep.subr.bf16.mxu0 0
      %258 = vmatpush1.bf16.xpose.msra.mxu0 0
      %259 = vmatprep.subr.bf16.mxu0 0
      %260 = vmatpush1.bf16.xpose.msra.mxu0 0
      %261 = vmatprep.subr.bf16.mxu0 0
      %262 = vmatpush1.bf16.xpose.msra.mxu0 %v245
      %263 = vmatprep.subr.bf16.mxu0 0
      %264 = vmatpush2.bf16.xpose.msra.mxu0 0
      %265 = vmatprep.subr.bf16.mxu0 0
      %266 = vmatpush2.bf16.xpose.msra.mxu0 0
      %267 = vmatprep.subr.bf16.mxu0 0
      %268 = vmatpush2.bf16.xpose.msra.mxu0 0
      %269 = vmatprep.subr.bf16.mxu0 0
      %270 = vmatpush2.bf16.xpose.msra.mxu0 0
      %271 = vmatprep.subr.bf16.mxu0 0
      %272 = vmatpush2.bf16.xpose.msra.mxu0 0
      %273 = vmatprep.subr.bf16.mxu0 0
      %274 = vmatpush2.bf16.xpose.msra.mxu0 0
      %275 = vmatprep.subr.bf16.mxu0 0
      %276 = vmatpush2.bf16.xpose.msra.mxu0 0
      %277 = vmatprep.subr.bf16.mxu0 0
      %278 = vmatpush2.bf16.xpose.msra.mxu0 0
      %279 = vmatprep.mubr.bf16.mxu0 0
      %280 = vmatmul.mubr.bf16.gmra.mxu0 %v242
      %v281 = vpop.f32.mrf.mxu0
      %v282 = vadd.f32 0.0, %v281
      %v283 = vpop.f32.mrf.mxu0
      %v284 = vpop.f32.mrf.mxu0
      %v285 = vpop.f32.mrf.mxu0
      %286 = vdwg.mxu0
      %v288 = vsel %vm240, %v221, 0
      %v291 = vsel %vm240, %v229, 0
      %293 = vmatprep.subr.bf16.mxu0 0
      %294 = vmatpush1.bf16.xpose.msra.mxu0 0
      %295 = vmatprep.subr.bf16.mxu0 0
      %296 = vmatpush1.bf16.xpose.msra.mxu0 0
      %297 = vmatprep.subr.bf16.mxu0 0
      %298 = vmatpush1.bf16.xpose.msra.mxu0 0
      %299 = vmatprep.subr.bf16.mxu0 0
      %300 = vmatpush1.bf16.xpose.msra.mxu0 0
      %301 = vmatprep.subr.bf16.mxu0 0
      %302 = vmatpush1.bf16.xpose.msra.mxu0 0
      %303 = vmatprep.subr.bf16.mxu0 0
      %304 = vmatpush1.bf16.xpose.msra.mxu0 0
      %305 = vmatprep.subr.bf16.mxu0 0
      %306 = vmatpush1.bf16.xpose.msra.mxu0 0
      %307 = vmatprep.subr.bf16.mxu0 0
      %308 = vmatpush1.bf16.xpose.msra.mxu0 %v291
      %309 = vmatprep.subr.bf16.mxu0 0
      %310 = vmatpush2.bf16.xpose.msra.mxu0 0
      %311 = vmatprep.subr.bf16.mxu0 0
      %312 = vmatpush2.bf16.xpose.msra.mxu0 0
      %313 = vmatprep.subr.bf16.mxu0 0
      %314 = vmatpush2.bf16.xpose.msra.mxu0 0
      %315 = vmatprep.subr.bf16.mxu0 0
      %316 = vmatpush2.bf16.xpose.msra.mxu0 0
      %317 = vmatprep.subr.bf16.mxu0 0
      %318 = vmatpush2.bf16.xpose.msra.mxu0 0
      %319 = vmatprep.subr.bf16.mxu0 0
      %320 = vmatpush2.bf16.xpose.msra.mxu0 0
      %321 = vmatprep.subr.bf16.mxu0 0
      %322 = vmatpush2.bf16.xpose.msra.mxu0 0
      %323 = vmatprep.subr.bf16.mxu0 0
      %324 = vmatpush2.bf16.xpose.msra.mxu0 0
      %325 = vmatprep.mubr.bf16.mxu0 0
      %326 = vmatmul.mubr.bf16.gmra.mxu0 %v288
      %v327 = vpop.f32.mrf.mxu0
      %v328 = vadd.f32 0.0, %v327
      %v329 = vpop.f32.mrf.mxu0
      %v330 = vpop.f32.mrf.mxu0
      %v331 = vpop.f32.mrf.mxu0
      %332 = vdwg.mxu0
      %v334 = vsel %vm240, %v222, 0
      %v337 = vsel %vm240, %v230, 0
      %339 = vmatprep.subr.bf16.mxu0 0
      %340 = vmatpush1.bf16.xpose.msra.mxu0 0
      %341 = vmatprep.subr.bf16.mxu0 0
      %342 = vmatpush1.bf16.xpose.msra.mxu0 0
      %343 = vmatprep.subr.bf16.mxu0 0
      %344 = vmatpush1.bf16.xpose.msra.mxu0 0
      %345 = vmatprep.subr.bf16.mxu0 0
      %346 = vmatpush1.bf16.xpose.msra.mxu0 0
      %347 = vmatprep.subr.bf16.mxu0 0
      %348 = vmatpush1.bf16.xpose.msra.mxu0 0
      %349 = vmatprep.subr.bf16.mxu0 0
      %350 = vmatpush1.bf16.xpose.msra.mxu0 0
      %351 = vmatprep.subr.bf16.mxu0 0
      %352 = vmatpush1.bf16.xpose.msra.mxu0 0
      %353 = vmatprep.subr.bf16.mxu0 0
      %354 = vmatpush1.bf16.xpose.msra.mxu0 %v337
      %355 = vmatprep.subr.bf16.mxu0 0
      %356 = vmatpush2.bf16.xpose.msra.mxu0 0
      %357 = vmatprep.subr.bf16.mxu0 0
      %358 = vmatpush2.bf16.xpose.msra.mxu0 0
      %359 = vmatprep.subr.bf16.mxu0 0
      %360 = vmatpush2.bf16.xpose.msra.mxu0 0
      %361 = vmatprep.subr.bf16.mxu0 0
      %362 = vmatpush2.bf16.xpose.msra.mxu0 0
      %363 = vmatprep.subr.bf16.mxu0 0
      %364 = vmatpush2.bf16.xpose.msra.mxu0 0
      %365 = vmatprep.subr.bf16.mxu0 0
      %366 = vmatpush2.bf16.xpose.msra.mxu0 0
      %367 = vmatprep.subr.bf16.mxu0 0
      %368 = vmatpush2.bf16.xpose.msra.mxu0 0
      %369 = vmatprep.subr.bf16.mxu0 0
      %370 = vmatpush2.bf16.xpose.msra.mxu0 0
      %371 = vmatprep.mubr.bf16.mxu0 0
      %372 = vmatmul.mubr.bf16.gmra.mxu0 %v334
      %v373 = vpop.f32.mrf.mxu0
      %v374 = vadd.f32 0.0, %v373
      %v375 = vpop.f32.mrf.mxu0
      %v376 = vpop.f32.mrf.mxu0
      %v377 = vpop.f32.mrf.mxu0
      %378 = vdwg.mxu0
      %v380 = vsel %vm240, %v223, 0
      %v383 = vsel %vm240, %v231, 0
      %385 = vmatprep.subr.bf16.mxu0 0
      %386 = vmatpush1.bf16.xpose.msra.mxu0 0
      %387 = vmatprep.subr.bf16.mxu0 0
      %388 = vmatpush1.bf16.xpose.msra.mxu0 0
      %389 = vmatprep.subr.bf16.mxu0 0
      %390 = vmatpush1.bf16.xpose.msra.mxu0 0
      %391 = vmatprep.subr.bf16.mxu0 0
      %392 = vmatpush1.bf16.xpose.msra.mxu0 0
      %393 = vmatprep.subr.bf16.mxu0 0
      %394 = vmatpush1.bf16.xpose.msra.mxu0 0
      %395 = vmatprep.subr.bf16.mxu0 0
      %396 = vmatpush1.bf16.xpose.msra.mxu0 0
      %397 = vmatprep.subr.bf16.mxu0 0
      %398 = vmatpush1.bf16.xpose.msra.mxu0 0
      %399 = vmatprep.subr.bf16.mxu0 0
      %400 = vmatpush1.bf16.xpose.msra.mxu0 %v383
      %401 = vmatprep.subr.bf16.mxu0 0
      %402 = vmatpush2.bf16.xpose.msra.mxu0 0
      %403 = vmatprep.subr.bf16.mxu0 0
      %404 = vmatpush2.bf16.xpose.msra.mxu0 0
      %405 = vmatprep.subr.bf16.mxu0 0
      %406 = vmatpush2.bf16.xpose.msra.mxu0 0
      %407 = vmatprep.subr.bf16.mxu0 0
      %408 = vmatpush2.bf16.xpose.msra.mxu0 0
      %409 = vmatprep.subr.bf16.mxu0 0
      %410 = vmatpush2.bf16.xpose.msra.mxu0 0
      %411 = vmatprep.subr.bf16.mxu0 0
      %412 = vmatpush2.bf16.xpose.msra.mxu0 0
      %413 = vmatprep.subr.bf16.mxu0 0
      %414 = vmatpush2.bf16.xpose.msra.mxu0 0
      %415 = vmatprep.subr.bf16.mxu0 0
      %416 = vmatpush2.bf16.xpose.msra.mxu0 0
      %417 = vmatprep.mubr.bf16.mxu0 0
      %418 = vmatmul.mubr.bf16.gmra.mxu0 %v380
      %v419 = vpop.f32.mrf.mxu0
      %v420 = vadd.f32 0.0, %v419
      %v421 = vpop.f32.mrf.mxu0
      %v422 = vpop.f32.mrf.mxu0
      %v423 = vpop.f32.mrf.mxu0
      %424 = vdwg.mxu0
      %vm425 = vcmask 36864
      %v426 = vsel %vm425, %v282, -inf
      %427 = vmax.xlane.f32.xlu0 %v426
      %v428 = vpop.xlane.xlu0 %427
      %v429 = vsel %vm425, %v328, -inf
      %430 = vmax.xlane.f32.xlu0 %v429
      %v431 = vpop.xlane.xlu0 %430
      %v432 = vsel %vm425, %v374, -inf
      %433 = vmax.xlane.f32.xlu0 %v432
      %v434 = vpop.xlane.xlu0 %433
      %v435 = vsel %vm425, %v420, -inf
      %436 = vmax.xlane.f32.xlu0 %v435
      %v437 = vpop.xlane.xlu0 %436
      %v438 = vsub.f32 %v282, %v428
      %v439 = vsub.f32 %v328, %v431
      %v440 = vsub.f32 %v374, %v434
      %v441 = vsub.f32 %v420, %v437
      %v442 = vmul.f32 %v438, 1.442695
      %v443 = vpow.pop %v442
      %v444 = vmul.f32 %v439, 1.442695
      %v445 = vpow.pop %v444
      %v446 = vmul.f32 %v440, 1.442695
      %v447 = vpow.pop %v446
      %v448 = vmul.f32 %v441, 1.442695
      %v449 = vpow.pop %v448
      %v450 = vsel %vm425, %v443, 0.0
      %451 = vadd.xlane.f32.xlu0 %v450
      %v452 = vpop.xlane.xlu0 %451
      %v453 = vsel %vm425, %v445, 0.0
      %454 = vadd.xlane.f32.xlu0 %v453
      %v455 = vpop.xlane.xlu0 %454
      %v456 = vsel %vm425, %v447, 0.0
      %457 = vadd.xlane.f32.xlu0 %v456
      %v458 = vpop.xlane.xlu0 %457
      %v459 = vsel %vm425, %v449, 0.0
      %460 = vadd.xlane.f32.xlu0 %v459
      %v461 = vpop.xlane.xlu0 %460
      %v462 = vrcp.pop %v452
      %v463 = vrcp.pop %v455
      %v464 = vrcp.pop %v458
      %v465 = vrcp.pop %v461
      %v466 = vmul.f32 %v443, %v462
      %v467 = vmul.f32 %v445, %v463
      %v468 = vmul.f32 %v447, %v464
      %v469 = vmul.f32 %v449, %v465
      %v470 = vpack.c.bf16 %v466, %v466
      %v471 = vpack.c.bf16 %v467, %v467
      %v472 = vpack.c.bf16 %v468, %v468
      %v473 = vpack.c.bf16 %v469, %v469
      %vm474 = vcmask 39936
      %v476 = vsel %vm474, %v470, 0
      %vm478 = vcmask 1041408
      %vm479 = vcmask 1042432
      %v480 = vsel %vm478, 4294967295, 65535
      %v481 = vsel %vm479, %v480, 0
      %v483 = vand.u32 %v236, %v481
      %485 = vmatprep.subr.bf16.mxu0 0
      %486 = vmatpush1.bf16.msra.mxu0 0
      %487 = vmatprep.subr.bf16.mxu0 0
      %488 = vmatpush1.bf16.msra.mxu0 0
      %489 = vmatprep.subr.bf16.mxu0 0
      %490 = vmatpush1.bf16.msra.mxu0 0
      %491 = vmatprep.subr.bf16.mxu0 0
      %492 = vmatpush1.bf16.msra.mxu0 0
      %493 = vmatprep.subr.bf16.mxu0 0
      %494 = vmatpush1.bf16.msra.mxu0 0
      %495 = vmatprep.subr.bf16.mxu0 0
      %496 = vmatpush1.bf16.msra.mxu0 0
      %497 = vmatprep.subr.bf16.mxu0 0
      %498 = vmatpush1.bf16.msra.mxu0 0
      %499 = vmatprep.subr.bf16.mxu0 0
      %500 = vmatpush1.bf16.msra.mxu0 %v483
      %501 = vmatprep.subr.bf16.mxu0 0
      %502 = vmatpush2.bf16.msra.mxu0 0
      %503 = vmatprep.subr.bf16.mxu0 0
      %504 = vmatpush2.bf16.msra.mxu0 0
      %505 = vmatprep.subr.bf16.mxu0 0
      %506 = vmatpush2.bf16.msra.mxu0 0
      %507 = vmatprep.subr.bf16.mxu0 0
      %508 = vmatpush2.bf16.msra.mxu0 0
      %509 = vmatprep.subr.bf16.mxu0 0
      %510 = vmatpush2.bf16.msra.mxu0 0
      %511 = vmatprep.subr.bf16.mxu0 0
      %512 = vmatpush2.bf16.msra.mxu0 0
      %513 = vmatprep.subr.bf16.mxu0 0
      %514 = vmatpush2.bf16.msra.mxu0 0
      %515 = vmatprep.subr.bf16.mxu0 0
      %516 = vmatpush2.bf16.msra.mxu0 0
      %517 = vmatprep.mubr.bf16.mxu0 0
      %518 = vmatmul.mubr.bf16.gmra.mxu0 %v476
      %v519 = vpop.f32.mrf.mxu0
      %v520 = vadd.f32 0.0, %v519
      %v521 = vpop.f32.mrf.mxu0
      %v522 = vpop.f32.mrf.mxu0
      %v523 = vpop.f32.mrf.mxu0
      %524 = vdwg.mxu0
      %v526 = vsel %vm474, %v471, 0
      %v529 = vand.u32 %v237, %v481
      %531 = vmatprep.subr.bf16.mxu0 0
      %532 = vmatpush1.bf16.msra.mxu0 0
      %533 = vmatprep.subr.bf16.mxu0 0
      %534 = vmatpush1.bf16.msra.mxu0 0
      %535 = vmatprep.subr.bf16.mxu0 0
      %536 = vmatpush1.bf16.msra.mxu0 0
      %537 = vmatprep.subr.bf16.mxu0 0
      %538 = vmatpush1.bf16.msra.mxu0 0
      %539 = vmatprep.subr.bf16.mxu0 0
      %540 = vmatpush1.bf16.msra.mxu0 0
      %541 = vmatprep.subr.bf16.mxu0 0
      %542 = vmatpush1.bf16.msra.mxu0 0
      %543 = vmatprep.subr.bf16.mxu0 0
      %544 = vmatpush1.bf16.msra.mxu0 0
      %545 = vmatprep.subr.bf16.mxu0 0
      %546 = vmatpush1.bf16.msra.mxu0 %v529
      %547 = vmatprep.subr.bf16.mxu0 0
      %548 = vmatpush2.bf16.msra.mxu0 0
      %549 = vmatprep.subr.bf16.mxu0 0
      %550 = vmatpush2.bf16.msra.mxu0 0
      %551 = vmatprep.subr.bf16.mxu0 0
      %552 = vmatpush2.bf16.msra.mxu0 0
      %553 = vmatprep.subr.bf16.mxu0 0
      %554 = vmatpush2.bf16.msra.mxu0 0
      %555 = vmatprep.subr.bf16.mxu0 0
      %556 = vmatpush2.bf16.msra.mxu0 0
      %557 = vmatprep.subr.bf16.mxu0 0
      %558 = vmatpush2.bf16.msra.mxu0 0
      %559 = vmatprep.subr.bf16.mxu0 0
      %560 = vmatpush2.bf16.msra.mxu0 0
      %561 = vmatprep.subr.bf16.mxu0 0
      %562 = vmatpush2.bf16.msra.mxu0 0
      %563 = vmatprep.mubr.bf16.mxu0 0
      %564 = vmatmul.mubr.bf16.gmra.mxu0 %v526
      %v565 = vpop.f32.mrf.mxu0
      %v566 = vadd.f32 0.0, %v565
      %v567 = vpop.f32.mrf.mxu0
      %v568 = vpop.f32.mrf.mxu0
      %v569 = vpop.f32.mrf.mxu0
      %570 = vdwg.mxu0
      %v572 = vsel %vm474, %v472, 0
      %v575 = vand.u32 %v238, %v481
      %577 = vmatprep.subr.bf16.mxu0 0
      %578 = vmatpush1.bf16.msra.mxu0 0
      %579 = vmatprep.subr.bf16.mxu0 0
      %580 = vmatpush1.bf16.msra.mxu0 0
      %581 = vmatprep.subr.bf16.mxu0 0
      %582 = vmatpush1.bf16.msra.mxu0 0
      %583 = vmatprep.subr.bf16.mxu0 0
      %584 = vmatpush1.bf16.msra.mxu0 0
      %585 = vmatprep.subr.bf16.mxu0 0
      %586 = vmatpush1.bf16.msra.mxu0 0
      %587 = vmatprep.subr.bf16.mxu0 0
      %588 = vmatpush1.bf16.msra.mxu0 0
      %589 = vmatprep.subr.bf16.mxu0 0
      %590 = vmatpush1.bf16.msra.mxu0 0
      %591 = vmatprep.subr.bf16.mxu0 0
      %592 = vmatpush1.bf16.msra.mxu0 %v575
      %593 = vmatprep.subr.bf16.mxu0 0
      %594 = vmatpush2.bf16.msra.mxu0 0
      %595 = vmatprep.subr.bf16.mxu0 0
      %596 = vmatpush2.bf16.msra.mxu0 0
      %597 = vmatprep.subr.bf16.mxu0 0
      %598 = vmatpush2.bf16.msra.mxu0 0
      %599 = vmatprep.subr.bf16.mxu0 0
      %600 = vmatpush2.bf16.msra.mxu0 0
      %601 = vmatprep.subr.bf16.mxu0 0
      %602 = vmatpush2.bf16.msra.mxu0 0
      %603 = vmatprep.subr.bf16.mxu0 0
      %604 = vmatpush2.bf16.msra.mxu0 0
      %605 = vmatprep.subr.bf16.mxu0 0
      %606 = vmatpush2.bf16.msra.mxu0 0
      %607 = vmatprep.subr.bf16.mxu0 0
      %608 = vmatpush2.bf16.msra.mxu0 0
      %609 = vmatprep.mubr.bf16.mxu0 0
      %610 = vmatmul.mubr.bf16.gmra.mxu0 %v572
      %v611 = vpop.f32.mrf.mxu0
      %v612 = vadd.f32 0.0, %v611
      %v613 = vpop.f32.mrf.mxu0
      %v614 = vpop.f32.mrf.mxu0
      %v615 = vpop.f32.mrf.mxu0
      %616 = vdwg.mxu0
      %v618 = vsel %vm474, %v473, 0
      %v621 = vand.u32 %v239, %v481
      %623 = vmatprep.subr.bf16.mxu0 0
      %624 = vmatpush1.bf16.msra.mxu0 0
      %625 = vmatprep.subr.bf16.mxu0 0
      %626 = vmatpush1.bf16.msra.mxu0 0
      %627 = vmatprep.subr.bf16.mxu0 0
      %628 = vmatpush1.bf16.msra.mxu0 0
      %629 = vmatprep.subr.bf16.mxu0 0
      %630 = vmatpush1.bf16.msra.mxu0 0
      %631 = vmatprep.subr.bf16.mxu0 0
      %632 = vmatpush1.bf16.msra.mxu0 0
      %633 = vmatprep.subr.bf16.mxu0 0
      %634 = vmatpush1.bf16.msra.mxu0 0
      %635 = vmatprep.subr.bf16.mxu0 0
      %636 = vmatpush1.bf16.msra.mxu0 0
      %637 = vmatprep.subr.bf16.mxu0 0
      %638 = vmatpush1.bf16.msra.mxu0 %v621
      %639 = vmatprep.subr.bf16.mxu0 0
      %640 = vmatpush2.bf16.msra.mxu0 0
      %641 = vmatprep.subr.bf16.mxu0 0
      %642 = vmatpush2.bf16.msra.mxu0 0
      %643 = vmatprep.subr.bf16.mxu0 0
      %644 = vmatpush2.bf16.msra.mxu0 0
      %645 = vmatprep.subr.bf16.mxu0 0
      %646 = vmatpush2.bf16.msra.mxu0 0
      %647 = vmatprep.subr.bf16.mxu0 0
      %648 = vmatpush2.bf16.msra.mxu0 0
      %649 = vmatprep.subr.bf16.mxu0 0
      %650 = vmatpush2.bf16.msra.mxu0 0
      %651 = vmatprep.subr.bf16.mxu0 0
      %652 = vmatpush2.bf16.msra.mxu0 0
      %653 = vmatprep.subr.bf16.mxu0 0
      %654 = vmatpush2.bf16.msra.mxu0 0
      %655 = vmatprep.mubr.bf16.mxu0 0
      %656 = vmatmul.mubr.bf16.gmra.mxu0 %v618
      %v657 = vpop.f32.mrf.mxu0
      %v658 = vadd.f32 0.0, %v657
      %v659 = vpop.f32.mrf.mxu0
      %v660 = vpop.f32.mrf.mxu0
      %v661 = vpop.f32.mrf.mxu0
      %662 = vdwg.mxu0
      %vm663 = vcmask 61440
      %664 = vst.msk [vmem:[%s210] sm:$0x1f] %vm663, %v520
      %665 = vst.msk [vmem:[%s210 + $0x8] sm:$0x1f] %vm663, %v566
      %666 = vst.msk [vmem:[%s210 + $0x10] sm:$0x1f] %vm663, %v612
      %667 = vst.msk [vmem:[%s210 + $0x18] sm:$0x1f] %vm663, %v658
      %p668 = scmp.lt.s32.totalorder %s14, 1
      %s669 = scalar_select %p668, %s14, 1
      %s670 = smul.addr %s669, 4
      %s671 = smul.addr %s670, 8
      %s672 = scalar_lea.vmem %s3, %s671
      // Predicated region
      $region33: #{vit_forward.14} parent=31 // pred_check
        %p673 = pneg %p110
      $region34: #{vit_forward.14} parent=31 // pred_check_branch
        %675 = sbr.rel (%p673) target = $region36
      $region35: #{vit_forward.14} parent=31 // pred_region
        _
      $region36: #{vit_forward.14} parent=31 // pred_fallthru
        _
    $region32: #{vit_forward.14} parent=5 // pred_fallthru
      _
    %p676 = scmp.le.s32.totalorder 2, %s9
    // Predicated region
    $region37: #{vit_forward.14} parent=5 // pred_check
      %p677 = pneg %p676
    $region38: #{vit_forward.14} parent=5 // pred_check_branch
      %679 = sbr.rel (%p677) target = $region40
    $region39: #{vit_forward.14} parent=5 // pred_region
      %s680 = ssub.s32 %s9, 2
      // Predicated region
      $region41: #{vit_forward.14} parent=39 // pred_check
        %p681 = pneg %p116
      $region42: #{vit_forward.14} parent=39 // pred_check_branch
        %683 = sbr.rel (%p681) target = $region44
      $region43: #{vit_forward.14} parent=39 // pred_region
        %p684 = scmp.lt.s32.totalorder %s15, 1
        %s685 = scalar_select %p684, %s15, 1
        %s686 = smul.addr %s685, 4
        %s687 = smul.addr %s686, 8
        %s688 = scalar_lea.vmem %s3, %s687
      $region44: #{vit_forward.14} parent=39 // pred_fallthru
        _
    $region40: #{vit_forward.14} parent=5 // pred_fallthru
      _
  $region6: #{vit_forward.14} parent=0 // loop_footer
    %s13 = sadd.s32 1, %s9
  $region7: #{vit_forward.14} parent=0 // loop_footer_branch
    %8 = sbr.rel target = $region3
  $region8: #{vit_forward.14} parent=0 // loop_exit
    _

// kernel: vit_forward.15
$region0: #{vit_forward.15}
  #allocation0 [shape = 'u32[]', space=smem, size = 0x4, offset = 0x4, fixed_abs, tag = 'smem constant byte address 0x4 - core index']
  #allocation1 [shape = 'u32[144,128]{1,0:T(1,128)}', space=vmem, size = 0x12000, scoped, tag = 'internal scratch']
  #allocation2 [shape = 'f32[10,128]{1,0:T(8,128)}', space=vmem, size = 0x2000, scoped, tag = 'scratch operand']
  %s0 = inlined_call_operand.vmem [shape: f32[10,32], index: 0, kind: input, shape index: {}]
  %s1 = inlined_call_operand.vmem [shape: bf16[32,128], index: 1, kind: input, shape index: {}]
  %s2 = inlined_call_operand.vmem [shape: f32[1,128], index: 2, kind: input, shape index: {}]
  %s3 = inlined_call_operand.vmem [shape: f32[10,128], index: 3, kind: input, shape index: {}]
  %s4 = inlined_call_operand.vmem [shape: f32[10,128], index: 4, kind: output, shape index: {}]
  %s5 = sld [smem:[#allocation0]]
  $region34: #{vit_forward.15} parent=0
    _
  %s7 = ssub.s32 1, %s5
  %s8 = scalar_select 0, %s7, %s5
  // Predicated region
  $region2: #{vit_forward.15} parent=0 // pred_check
    _
  $region3: #{vit_forward.15} parent=0 // pred_check_branch
    %10 = sbr.rel (0) target = $region5
  $region4: #{vit_forward.15} parent=0 // pred_region
    _
  $region5: #{vit_forward.15} parent=0 // pred_fallthru
    _
  // Predicated region
  $region6: #{vit_forward.15} parent=0 // pred_check
    _
  $region7: #{vit_forward.15} parent=0 // pred_check_branch
    %12 = sbr.rel (0) target = $region9
  $region8: #{vit_forward.15} parent=0 // pred_region
    _
  $region9: #{vit_forward.15} parent=0 // pred_fallthru
    _
  // Predicated region
  $region10: #{vit_forward.15} parent=0 // pred_check
    _
  $region11: #{vit_forward.15} parent=0 // pred_check_branch
    %14 = sbr.rel (0) target = $region13
  $region12: #{vit_forward.15} parent=0 // pred_region
    _
  $region13: #{vit_forward.15} parent=0 // pred_fallthru
    _
  // Predicated region
  $region14: #{vit_forward.15} parent=0 // pred_check
    _
  $region15: #{vit_forward.15} parent=0 // pred_check_branch
    %16 = sbr.rel (0) target = $region17
  $region16: #{vit_forward.15} parent=0 // pred_region
    _
  $region17: #{vit_forward.15} parent=0 // pred_fallthru
    _
  %p18 = scmp.eq.s32.totalorder 0, 0
  // Predicated region
  $region18: #{vit_forward.15} parent=0 // pred_check
    %p19 = pneg %p18
  $region19: #{vit_forward.15} parent=0 // pred_check_branch
    %21 = sbr.rel (%p19) target = $region21
  $region20: #{vit_forward.15} parent=0 // pred_region
    %22 = vst [vmem:[#allocation2] sm:$0xff] 0.0
    %23 = vst [vmem:[#allocation2 + $0x8] sm:$0x3] 0.0
  $region21: #{vit_forward.15} parent=0 // pred_fallthru
    _
  %v24 = vld [vmem:[%s0] sm:$0xff]
  %v25 = vld [vmem:[%s0 + $0x8] sm:$0x3]
  %v26 = vld [vmem:[#allocation2] sm:$0xff]
  %v27 = vld [vmem:[#allocation2 + $0x8] sm:$0x3]
  %v28 = vpack.c.bf16 %v25, %v24
  %v29 = vld [vmem:[%s1] sm:$0xf]
  %v30 = vld [vmem:[%s1 + $0x4] sm:$0xf]
  %v31 = vld [vmem:[%s1 + $0x8] sm:$0xf]
  %v32 = vld [vmem:[%s1 + $0xc] sm:$0xf]
  %v37 = vunpack.c.l.b16 %v29
  %v38 = vunpack.c.l.b16 %v30
  %v39 = vunpack.c.l.b16 %v31
  %v40 = vunpack.c.l.b16 %v32
  %v41 = vpack.c.b16 %v38, %v37
  %v42 = vpack.c.b16 %v40, %v39
  %vm45 = vcmask 261120
  %v47 = vsel %vm45, %v28, 0
  %49 = vmatprep.subr.bf16.mxu0 0
  %50 = vmatpush1.bf16.msra.mxu0 0
  %51 = vmatprep.subr.bf16.mxu0 0
  %52 = vmatpush1.bf16.msra.mxu0 0
  %53 = vmatprep.subr.bf16.mxu0 0
  %54 = vmatpush1.bf16.msra.mxu0 0
  %55 = vmatprep.subr.bf16.mxu0 0
  %56 = vmatpush1.bf16.msra.mxu0 0
  %57 = vmatprep.subr.bf16.mxu0 0
  %58 = vmatpush1.bf16.msra.mxu0 0
  %59 = vmatprep.subr.bf16.mxu0 0
  %60 = vmatpush1.bf16.msra.mxu0 0
  %61 = vmatprep.subr.bf16.mxu0 0
  %62 = vmatpush1.bf16.msra.mxu0 %v42
  %63 = vmatprep.subr.bf16.mxu0 0
  %64 = vmatpush1.bf16.msra.mxu0 %v41
  %65 = vmatprep.subr.bf16.mxu0 0
  %66 = vmatpush2.bf16.msra.mxu0 0
  %67 = vmatprep.subr.bf16.mxu0 0
  %68 = vmatpush2.bf16.msra.mxu0 0
  %69 = vmatprep.subr.bf16.mxu0 0
  %70 = vmatpush2.bf16.msra.mxu0 0
  %71 = vmatprep.subr.bf16.mxu0 0
  %72 = vmatpush2.bf16.msra.mxu0 0
  %73 = vmatprep.subr.bf16.mxu0 0
  %74 = vmatpush2.bf16.msra.mxu0 0
  %75 = vmatprep.subr.bf16.mxu0 0
  %76 = vmatpush2.bf16.msra.mxu0 0
  %77 = vmatprep.subr.bf16.mxu0 0
  %78 = vmatpush2.bf16.msra.mxu0 0
  %79 = vmatprep.subr.bf16.mxu0 0
  %80 = vmatpush2.bf16.msra.mxu0 0
  %81 = vmatprep.mubr.bf16.mxu0 0
  %82 = vmatmul.mubr.bf16.gmra.mxu0 %v47
  %v83 = vpop.f32.mrf.mxu0
  %v84 = vadd.f32 0.0, %v83
  %v85 = vpop.f32.mrf.mxu0
  %v86 = vpop.f32.mrf.mxu0
  %v87 = vadd.f32 0.0, %v86
  %v88 = vpop.f32.mrf.mxu0
  %89 = vdwg.mxu0
  %v90 = vadd.f32 %v26, %v84
  %v91 = vadd.f32 %v27, %v87
  %92 = vst [vmem:[#allocation2] sm:$0xff] %v90
  %93 = vst [vmem:[#allocation2 + $0x8] sm:$0x3] %v91
  // Predicated region
  $region22: #{vit_forward.15} parent=0 // pred_check
    %p94 = pneg %p18
  $region23: #{vit_forward.15} parent=0 // pred_check_branch
    %96 = sbr.rel (%p94) target = $region25
  $region24: #{vit_forward.15} parent=0 // pred_region
    %v97 = vld [vmem:[#allocation2] sm:$0xff]
    %v98 = vld [vmem:[#allocation2 + $0x8] sm:$0x3]
    %v99 = vld [vmem:[%s2] sm:$0x1]
    %v101 = vlaneseq
    %v102 = vshrl.u32 %v101, 7
    %v103 = vsub.s32 0, %v102
    %v104 = vrot.slane %v99, %v103
    %v106 = vadd.f32 %v97, %v104
    %v107 = vadd.f32 %v98, %v104
    %v108 = vld [vmem:[%s3] sm:$0xff]
    %v109 = vld [vmem:[%s3 + $0x8] sm:$0x3]
    %v110 = vadd.f32 %v106, %v108
    %v111 = vadd.f32 %v107, %v109
    %112 = vst [vmem:[%s4] sm:$0xff] %v110
    %113 = vst [vmem:[%s4 + $0x8] sm:$0x3] %v111
  $region25: #{vit_forward.15} parent=0 // pred_fallthru
    _
  // Predicated region
  $region26: #{vit_forward.15} parent=0 // pred_check
    _
  $region27: #{vit_forward.15} parent=0 // pred_check_branch
    %115 = sbr.rel (0) target = $region29
  $region28: #{vit_forward.15} parent=0 // pred_region
    _
  $region29: #{vit_forward.15} parent=0 // pred_fallthru
    _
  // Predicated region
  $region30: #{vit_forward.15} parent=0 // pred_check
    _
  $region31: #{vit_forward.15} parent=0 // pred_check_branch
    %117 = sbr.rel (0) target = $region33
  $region32: #{vit_forward.15} parent=0 // pred_region
    _
  $region33: #{vit_forward.15} parent=0 // pred_fallthru
    _

// kernel: vit_forward.17
$region0: #{vit_forward.17}
  #allocation0 [shape = 'u32[]', space=smem, size = 0x4, offset = 0x4, fixed_abs, tag = 'smem constant byte address 0x4 - core index']
  #allocation1 [shape = 'u32[144,128]{1,0:T(1,128)}', space=vmem, size = 0x12000, scoped, tag = 'internal scratch']
  #allocation2 [shape = 'f32[10,128]{1,0:T(8,128)}', space=vmem, size = 0x2000, scoped, tag = 'scratch operand']
  %s0 = inlined_call_operand.vmem [shape: f32[10,64], index: 0, kind: input, shape index: {}]
  %s1 = inlined_call_operand.vmem [shape: bf16[64,128], index: 1, kind: input, shape index: {}]
  %s2 = inlined_call_operand.vmem [shape: f32[1,128], index: 2, kind: input, shape index: {}]
  %s3 = inlined_call_operand.vmem [shape: f32[10,128], index: 3, kind: input, shape index: {}]
  %s4 = inlined_call_operand.vmem [shape: f32[10,128], index: 4, kind: output, shape index: {}]
  %s5 = sld [smem:[#allocation0]]
  $region34: #{vit_forward.17} parent=0
    _
  %s7 = ssub.s32 1, %s5
  %s8 = scalar_select 0, %s7, %s5
  // Predicated region
  $region2: #{vit_forward.17} parent=0 // pred_check
    _
  $region3: #{vit_forward.17} parent=0 // pred_check_branch
    %10 = sbr.rel (0) target = $region5
  $region4: #{vit_forward.17} parent=0 // pred_region
    _
  $region5: #{vit_forward.17} parent=0 // pred_fallthru
    _
  // Predicated region
  $region6: #{vit_forward.17} parent=0 // pred_check
    _
  $region7: #{vit_forward.17} parent=0 // pred_check_branch
    %12 = sbr.rel (0) target = $region9
  $region8: #{vit_forward.17} parent=0 // pred_region
    _
  $region9: #{vit_forward.17} parent=0 // pred_fallthru
    _
  // Predicated region
  $region10: #{vit_forward.17} parent=0 // pred_check
    _
  $region11: #{vit_forward.17} parent=0 // pred_check_branch
    %14 = sbr.rel (0) target = $region13
  $region12: #{vit_forward.17} parent=0 // pred_region
    _
  $region13: #{vit_forward.17} parent=0 // pred_fallthru
    _
  // Predicated region
  $region14: #{vit_forward.17} parent=0 // pred_check
    _
  $region15: #{vit_forward.17} parent=0 // pred_check_branch
    %16 = sbr.rel (0) target = $region17
  $region16: #{vit_forward.17} parent=0 // pred_region
    _
  $region17: #{vit_forward.17} parent=0 // pred_fallthru
    _
  %p18 = scmp.eq.s32.totalorder 0, 0
  // Predicated region
  $region18: #{vit_forward.17} parent=0 // pred_check
    %p19 = pneg %p18
  $region19: #{vit_forward.17} parent=0 // pred_check_branch
    %21 = sbr.rel (%p19) target = $region21
  $region20: #{vit_forward.17} parent=0 // pred_region
    %22 = vst [vmem:[#allocation2] sm:$0xff] 0.0
    %23 = vst [vmem:[#allocation2 + $0x8] sm:$0x3] 0.0
  $region21: #{vit_forward.17} parent=0 // pred_fallthru
    _
  %v24 = vld [vmem:[%s0] sm:$0xff]
  %v25 = vld [vmem:[%s0 + $0x8] sm:$0x3]
  %v26 = vld [vmem:[#allocation2] sm:$0xff]
  %v27 = vld [vmem:[#allocation2 + $0x8] sm:$0x3]
  %v28 = vpack.c.bf16 %v25, %v24
  %v29 = vld [vmem:[%s1] sm:$0xf]
  %v30 = vld [vmem:[%s1 + $0x4] sm:$0xf]
  %v31 = vld [vmem:[%s1 + $0x8] sm:$0xf]
  %v32 = vld [vmem:[%s1 + $0xc] sm:$0xf]
  %v33 = vld [vmem:[%s1 + $0x10] sm:$0xf]
  %v34 = vld [vmem:[%s1 + $0x14] sm:$0xf]
  %v35 = vld [vmem:[%s1 + $0x18] sm:$0xf]
  %v36 = vld [vmem:[%s1 + $0x1c] sm:$0xf]
  %v45 = vunpack.c.l.b16 %v29
  %v46 = vunpack.c.l.b16 %v30
  %v47 = vunpack.c.l.b16 %v31
  %v48 = vunpack.c.l.b16 %v32
  %v49 = vunpack.c.l.b16 %v33
  %v50 = vunpack.c.l.b16 %v34
  %v51 = vunpack.c.l.b16 %v35
  %v52 = vunpack.c.l.b16 %v36
  %v53 = vpack.c.b16 %v46, %v45
  %v54 = vpack.c.b16 %v48, %v47
  %v55 = vpack.c.b16 %v50, %v49
  %v56 = vpack.c.b16 %v52, %v51
  %vm61 = vcmask 523264
  %v63 = vsel %vm61, %v28, 0
  %65 = vmatprep.subr.bf16.mxu0 0
  %66 = vmatpush1.bf16.msra.mxu0 0
  %67 = vmatprep.subr.bf16.mxu0 0
  %68 = vmatpush1.bf16.msra.mxu0 0
  %69 = vmatprep.subr.bf16.mxu0 0
  %70 = vmatpush1.bf16.msra.mxu0 0
  %71 = vmatprep.subr.bf16.mxu0 0
  %72 = vmatpush1.bf16.msra.mxu0 0
  %73 = vmatprep.subr.bf16.mxu0 0
  %74 = vmatpush1.bf16.msra.mxu0 %v56
  %75 = vmatprep.subr.bf16.mxu0 0
  %76 = vmatpush1.bf16.msra.mxu0 %v55
  %77 = vmatprep.subr.bf16.mxu0 0
  %78 = vmatpush1.bf16.msra.mxu0 %v54
  %79 = vmatprep.subr.bf16.mxu0 0
  %80 = vmatpush1.bf16.msra.mxu0 %v53
  %81 = vmatprep.subr.bf16.mxu0 0
  %82 = vmatpush2.bf16.msra.mxu0 0
  %83 = vmatprep.subr.bf16.mxu0 0
  %84 = vmatpush2.bf16.msra.mxu0 0
  %85 = vmatprep.subr.bf16.mxu0 0
  %86 = vmatpush2.bf16.msra.mxu0 0
  %87 = vmatprep.subr.bf16.mxu0 0
  %88 = vmatpush2.bf16.msra.mxu0 0
  %89 = vmatprep.subr.bf16.mxu0 0
  %90 = vmatpush2.bf16.msra.mxu0 0
  %91 = vmatprep.subr.bf16.mxu0 0
  %92 = vmatpush2.bf16.msra.mxu0 0
  %93 = vmatprep.subr.bf16.mxu0 0
  %94 = vmatpush2.bf16.msra.mxu0 0
  %95 = vmatprep.subr.bf16.mxu0 0
  %96 = vmatpush2.bf16.msra.mxu0 0
  %97 = vmatprep.mubr.bf16.mxu0 0
  %98 = vmatmul.mubr.bf16.gmra.mxu0 %v63
  %v99 = vpop.f32.mrf.mxu0
  %v100 = vadd.f32 0.0, %v99
  %v101 = vpop.f32.mrf.mxu0
  %v102 = vpop.f32.mrf.mxu0
  %v103 = vadd.f32 0.0, %v102
  %v104 = vpop.f32.mrf.mxu0
  %105 = vdwg.mxu0
  %v106 = vadd.f32 %v26, %v100
  %v107 = vadd.f32 %v27, %v103
  %108 = vst [vmem:[#allocation2] sm:$0xff] %v106
  %109 = vst [vmem:[#allocation2 + $0x8] sm:$0x3] %v107
  // Predicated region
  $region22: #{vit_forward.17} parent=0 // pred_check
    %p110 = pneg %p18
  $region23: #{vit_forward.17} parent=0 // pred_check_branch
    %112 = sbr.rel (%p110) target = $region25
  $region24: #{vit_forward.17} parent=0 // pred_region
    %v113 = vld [vmem:[#allocation2] sm:$0xff]
    %v114 = vld [vmem:[#allocation2 + $0x8] sm:$0x3]
    %v115 = vld [vmem:[%s2] sm:$0x1]
    %v117 = vlaneseq
    %v118 = vshrl.u32 %v117, 7
    %v119 = vsub.s32 0, %v118
    %v120 = vrot.slane %v115, %v119
    %v122 = vadd.f32 %v113, %v120
    %v123 = vadd.f32 %v114, %v120
    %v124 = vld [vmem:[%s3] sm:$0xff]
    %v125 = vld [vmem:[%s3 + $0x8] sm:$0x3]
    %v126 = vadd.f32 %v122, %v124
    %v127 = vadd.f32 %v123, %v125
    %128 = vst [vmem:[%s4] sm:$0xff] %v126
    %129 = vst [vmem:[%s4 + $0x8] sm:$0x3] %v127
  $region25: #{vit_forward.17} parent=0 // pred_fallthru
    _
  // Predicated region
  $region26: #{vit_forward.17} parent=0 // pred_check
    _
  $region27: #{vit_forward.17} parent=0 // pred_check_branch
    %131 = sbr.rel (0) target = $region29
  $region28: #{vit_forward.17} parent=0 // pred_region
    _
  $region29: #{vit_forward.17} parent=0 // pred_fallthru
    _
  // Predicated region
  $region30: #{vit_forward.17} parent=0 // pred_check
    _
  $region31: #{vit_forward.17} parent=0 // pred_check_branch
    %133 = sbr.rel (0) target = $region33
  $region32: #{vit_forward.17} parent=0 // pred_region
    _
  $region33: #{vit_forward.17} parent=0 // pred_fallthru
    _

// kernel: vit_forward.16
$region0: #{vit_forward.16}
  #allocation0 [shape = 'u32[]', space=smem, size = 0x4, offset = 0x4, fixed_abs, tag = 'smem constant byte address 0x4 - core index']
  #allocation1 [shape = 'u32[144,128]{1,0:T(1,128)}', space=vmem, size = 0x12000, scoped, tag = 'internal scratch']
  #allocation2 [shape = 'f32[10,128]{1,0:T(8,128)}', space=vmem, size = 0x2000, scoped, tag = 'scratch operand']
  %s0 = inlined_call_operand.vmem [shape: f32[10,32], index: 0, kind: input, shape index: {}]
  %s1 = inlined_call_operand.vmem [shape: bf16[32,128], index: 1, kind: input, shape index: {}]
  %s2 = inlined_call_operand.vmem [shape: f32[1,128], index: 2, kind: input, shape index: {}]
  %s3 = inlined_call_operand.vmem [shape: f32[1,32], index: 3, kind: input, shape index: {}]
  %s4 = inlined_call_operand.vmem [shape: f32[1,32], index: 4, kind: input, shape index: {}]
  %s5 = inlined_call_operand.vmem [shape: f32[10,128], index: 5, kind: output, shape index: {}]
  %s6 = sld [smem:[#allocation0]]
  $region38: #{vit_forward.16} parent=0
    _
  %s8 = ssub.s32 1, %s6
  %s9 = scalar_select 0, %s8, %s6
  // Predicated region
  $region2: #{vit_forward.16} parent=0 // pred_check
    _
  $region3: #{vit_forward.16} parent=0 // pred_check_branch
    %11 = sbr.rel (0) target = $region5
  $region4: #{vit_forward.16} parent=0 // pred_region
    _
  $region5: #{vit_forward.16} parent=0 // pred_fallthru
    _
  // Predicated region
  $region6: #{vit_forward.16} parent=0 // pred_check
    _
  $region7: #{vit_forward.16} parent=0 // pred_check_branch
    %13 = sbr.rel (0) target = $region9
  $region8: #{vit_forward.16} parent=0 // pred_region
    _
  $region9: #{vit_forward.16} parent=0 // pred_fallthru
    _
  // Predicated region
  $region10: #{vit_forward.16} parent=0 // pred_check
    _
  $region11: #{vit_forward.16} parent=0 // pred_check_branch
    %15 = sbr.rel (0) target = $region13
  $region12: #{vit_forward.16} parent=0 // pred_region
    _
  $region13: #{vit_forward.16} parent=0 // pred_fallthru
    _
  // Predicated region
  $region14: #{vit_forward.16} parent=0 // pred_check
    _
  $region15: #{vit_forward.16} parent=0 // pred_check_branch
    %17 = sbr.rel (0) target = $region17
  $region16: #{vit_forward.16} parent=0 // pred_region
    _
  $region17: #{vit_forward.16} parent=0 // pred_fallthru
    _
  // Predicated region
  $region18: #{vit_forward.16} parent=0 // pred_check
    _
  $region19: #{vit_forward.16} parent=0 // pred_check_branch
    %19 = sbr.rel (0) target = $region21
  $region20: #{vit_forward.16} parent=0 // pred_region
    _
  $region21: #{vit_forward.16} parent=0 // pred_fallthru
    _
  %p21 = scmp.eq.s32.totalorder 0, 0
  // Predicated region
  $region22: #{vit_forward.16} parent=0 // pred_check
    %p22 = pneg %p21
  $region23: #{vit_forward.16} parent=0 // pred_check_branch
    %24 = sbr.rel (%p22) target = $region25
  $region24: #{vit_forward.16} parent=0 // pred_region
    %25 = vst [vmem:[#allocation2] sm:$0xff] 0.0
    %26 = vst [vmem:[#allocation2 + $0x8] sm:$0x3] 0.0
  $region25: #{vit_forward.16} parent=0 // pred_fallthru
    _
  %v27 = vld [vmem:[%s0] sm:$0xff]
  %v28 = vld [vmem:[%s0 + $0x8] sm:$0x3]
  %vm29 = vcmask 261120
  %v30 = vsel %vm29, %v27, 0.0
  %31 = vadd.xlane.f32.xlu0 %v30
  %v32 = vpop.xlane.xlu0 %31
  %vm33 = vcmask 254976
  %v34 = vsel %vm33, %v28, 0.0
  %35 = vadd.xlane.f32.xlu0 %v34
  %v36 = vpop.xlane.xlu0 %35
  %v37 = vrcp.pop 32.0
  %v38 = vmul.f32 %v32, %v37
  %v39 = vmul.f32 %v36, %v37
  %v40 = vsub.f32 %v27, %v38
  %v41 = vsub.f32 %v28, %v39
  %v42 = vmul.f32 %v40, %v40
  %v43 = vmul.f32 %v41, %v41
  %v44 = vsel %vm29, %v42, 0.0
  %45 = vadd.xlane.f32.xlu0 %v44
  %v46 = vpop.xlane.xlu0 %45
  %v47 = vsel %vm33, %v43, 0.0
  %48 = vadd.xlane.f32.xlu0 %v47
  %v49 = vpop.xlane.xlu0 %48
  %v50 = vmul.f32 %v46, %v37
  %v51 = vmul.f32 %v49, %v37
  %v52 = vadd.f32 %v50, 1e-12
  %v53 = vadd.f32 %v51, 1e-12
  %v54 = vrsqrt.pop %v52
  %v55 = vrsqrt.pop %v53
  %v56 = vmul.f32 %v40, %v54
  %v57 = vmul.f32 %v41, %v55
  %v58 = vld [vmem:[%s3] sm:$0x1]
  %v60 = vlaneseq
  %v61 = vshrl.u32 %v60, 7
  %v62 = vsub.s32 0, %v61
  %v63 = vrot.slane %v58, %v62
  %v65 = vmul.f32 %v56, %v63
  %v66 = vmul.f32 %v57, %v63
  %v67 = vld [vmem:[%s4] sm:$0x1]
  %v69 = vlaneseq
  %v70 = vshrl.u32 %v69, 7
  %v71 = vsub.s32 0, %v70
  %v72 = vrot.slane %v67, %v71
  %v74 = vadd.f32 %v65, %v72
  %v75 = vadd.f32 %v66, %v72
  %v76 = vld [vmem:[#allocation2] sm:$0xff]
  %v77 = vld [vmem:[#allocation2 + $0x8] sm:$0x3]
  %v78 = vpack.c.bf16 %v75, %v74
  %v79 = vld [vmem:[%s1] sm:$0xf]
  %v80 = vld [vmem:[%s1 + $0x4] sm:$0xf]
  %v81 = vld [vmem:[%s1 + $0x8] sm:$0xf]
  %v82 = vld [vmem:[%s1 + $0xc] sm:$0xf]
  %v87 = vunpack.c.l.b16 %v79
  %v88 = vunpack.c.l.b16 %v80
  %v89 = vunpack.c.l.b16 %v81
  %v90 = vunpack.c.l.b16 %v82
  %v91 = vpack.c.b16 %v88, %v87
  %v92 = vpack.c.b16 %v90, %v89
  %v96 = vsel %vm29, %v78, 0
  %98 = vmatprep.subr.bf16.mxu0 0
  %99 = vmatpush1.bf16.msra.mxu0 0
  %100 = vmatprep.subr.bf16.mxu0 0
  %101 = vmatpush1.bf16.msra.mxu0 0
  %102 = vmatprep.subr.bf16.mxu0 0
  %103 = vmatpush1.bf16.msra.mxu0 0
  %104 = vmatprep.subr.bf16.mxu0 0
  %105 = vmatpush1.bf16.msra.mxu0 0
  %106 = vmatprep.subr.bf16.mxu0 0
  %107 = vmatpush1.bf16.msra.mxu0 0
  %108 = vmatprep.subr.bf16.mxu0 0
  %109 = vmatpush1.bf16.msra.mxu0 0
  %110 = vmatprep.subr.bf16.mxu0 0
  %111 = vmatpush1.bf16.msra.mxu0 %v92
  %112 = vmatprep.subr.bf16.mxu0 0
  %113 = vmatpush1.bf16.msra.mxu0 %v91
  %114 = vmatprep.subr.bf16.mxu0 0
  %115 = vmatpush2.bf16.msra.mxu0 0
  %116 = vmatprep.subr.bf16.mxu0 0
  %117 = vmatpush2.bf16.msra.mxu0 0
  %118 = vmatprep.subr.bf16.mxu0 0
  %119 = vmatpush2.bf16.msra.mxu0 0
  %120 = vmatprep.subr.bf16.mxu0 0
  %121 = vmatpush2.bf16.msra.mxu0 0
  %122 = vmatprep.subr.bf16.mxu0 0
  %123 = vmatpush2.bf16.msra.mxu0 0
  %124 = vmatprep.subr.bf16.mxu0 0
  %125 = vmatpush2.bf16.msra.mxu0 0
  %126 = vmatprep.subr.bf16.mxu0 0
  %127 = vmatpush2.bf16.msra.mxu0 0
  %128 = vmatprep.subr.bf16.mxu0 0
  %129 = vmatpush2.bf16.msra.mxu0 0
  %130 = vmatprep.mubr.bf16.mxu0 0
  %131 = vmatmul.mubr.bf16.gmra.mxu0 %v96
  %v132 = vpop.f32.mrf.mxu0
  %v133 = vadd.f32 0.0, %v132
  %v134 = vpop.f32.mrf.mxu0
  %v135 = vpop.f32.mrf.mxu0
  %v136 = vadd.f32 0.0, %v135
  %v137 = vpop.f32.mrf.mxu0
  %138 = vdwg.mxu0
  %v139 = vadd.f32 %v76, %v133
  %v140 = vadd.f32 %v77, %v136
  %141 = vst [vmem:[#allocation2] sm:$0xff] %v139
  %142 = vst [vmem:[#allocation2 + $0x8] sm:$0x3] %v140
  // Predicated region
  $region26: #{vit_forward.16} parent=0 // pred_check
    %p143 = pneg %p21
  $region27: #{vit_forward.16} parent=0 // pred_check_branch
    %145 = sbr.rel (%p143) target = $region29
  $region28: #{vit_forward.16} parent=0 // pred_region
    %v146 = vld [vmem:[#allocation2] sm:$0xff]
    %v147 = vld [vmem:[#allocation2 + $0x8] sm:$0x3]
    %v148 = vld [vmem:[%s2] sm:$0x1]
    %v150 = vlaneseq
    %v151 = vshrl.u32 %v150, 7
    %v152 = vsub.s32 0, %v151
    %v153 = vrot.slane %v148, %v152
    %v155 = vadd.f32 %v146, %v153
    %v156 = vadd.f32 %v147, %v153
    %v157 = vmul.f32 %v155, 0.5
    %v158 = vmul.f32 %v156, 0.5
    %v159 = vmul.f32 %v155, 0.044715
    %v160 = vmul.f32 %v156, 0.044715
    %v161 = vmul.f32 %v159, %v155
    %v162 = vmul.f32 %v160, %v156
    %v163 = vmul.f32 %v161, %v155
    %v164 = vmul.f32 %v162, %v156
    %v165 = vadd.f32 %v155, %v163
    %v166 = vadd.f32 %v156, %v164
    %v167 = vmul.f32 %v165, 0.7978846
    %v168 = vmul.f32 %v166, 0.7978846
    %v169 = vtanh.pop %v167
    %v170 = vtanh.pop %v168
    %v171 = vadd.f32 %v169, 1.0
    %v172 = vadd.f32 %v170, 1.0
    %v173 = vmul.f32 %v157, %v171
    %v174 = vmul.f32 %v158, %v172
    %175 = vst [vmem:[%s5] sm:$0xff] %v173
    %176 = vst [vmem:[%s5 + $0x8] sm:$0x3] %v174
  $region29: #{vit_forward.16} parent=0 // pred_fallthru
    _
  // Predicated region
  $region30: #{vit_forward.16} parent=0 // pred_check
    _
  $region31: #{vit_forward.16} parent=0 // pred_check_branch
    %178 = sbr.rel (0) target = $region33
  $region32: #{vit_forward.16} parent=0 // pred_region
    _
  $region33: #{vit_forward.16} parent=0 // pred_fallthru
    _
  // Predicated region
  $region34: #{vit_forward.16} parent=0 // pred_check
    _
  $region35: #{vit_forward.16} parent=0 // pred_check_branch
    %180 = sbr.rel (0) target = $region37
  $region36: #{vit_forward.16} parent=0 // pred_region
    _
  $region37: #{vit_forward.16} parent=0 // pred_fallthru
    _

// kernel: vit_forward.23
$region0: #{vit_forward.23}
  #allocation0 [shape = 'u32[]', space=smem, size = 0x4, offset = 0x4, fixed_abs, tag = 'smem constant byte address 0x4 - core index']
  #allocation1 [shape = 'u32[144,128]{1,0:T(1,128)}', space=vmem, size = 0x12000, scoped, tag = 'internal scratch']
  #allocation2 [shape = 'f32[2,128]{1,0:T(2,128)}', space=vmem, size = 0x400, scoped, tag = 'scratch operand']
  %s0 = inlined_call_operand.vmem [shape: f32[2,32], index: 0, kind: input, shape index: {}]
  %s1 = inlined_call_operand.vmem [shape: bf16[32,128], index: 1, kind: input, shape index: {}]
  %s2 = inlined_call_operand.vmem [shape: f32[1,128], index: 2, kind: input, shape index: {}]
  %s3 = inlined_call_operand.vmem [shape: f32[1,32], index: 3, kind: input, shape index: {}]
  %s4 = inlined_call_operand.vmem [shape: f32[1,32], index: 4, kind: input, shape index: {}]
  %s5 = inlined_call_operand.hbm [shape: f32[2,128], index: 5, kind: output, shape index: {}]
  %s6 = sld [smem:[#allocation0]]
  $region38: #{vit_forward.23} parent=0
    _
  %s8 = ssub.s32 1, %s6
  %s9 = scalar_select 0, %s8, %s6
  $region1: #{vit_forward.23} parent=0
    #allocation3 [shape = 'u8[1024]{0}', space=vmem, size = 0x400, scoped, tag = 'output window, operand 0, single buffered']
    #allocation4 [shape = 's32[1]{0}', space=sflag, size = 0x4, scoped, tag = 'scoped memory for vit_forward.23']
    %10 = vsyncpa [#allocation4], 0
    // Predicated region
    $region2: #{vit_forward.23} parent=1 // pred_check
      _
    $region3: #{vit_forward.23} parent=1 // pred_check_branch
      %12 = sbr.rel (0) target = $region5
    $region4: #{vit_forward.23} parent=1 // pred_region
      _
    $region5: #{vit_forward.23} parent=1 // pred_fallthru
      _
    // Predicated region
    $region6: #{vit_forward.23} parent=1 // pred_check
      _
    $region7: #{vit_forward.23} parent=1 // pred_check_branch
      %14 = sbr.rel (0) target = $region9
    $region8: #{vit_forward.23} parent=1 // pred_region
      _
    $region9: #{vit_forward.23} parent=1 // pred_fallthru
      _
    // Predicated region
    $region10: #{vit_forward.23} parent=1 // pred_check
      _
    $region11: #{vit_forward.23} parent=1 // pred_check_branch
      %16 = sbr.rel (0) target = $region13
    $region12: #{vit_forward.23} parent=1 // pred_region
      _
    $region13: #{vit_forward.23} parent=1 // pred_fallthru
      _
    // Predicated region
    $region14: #{vit_forward.23} parent=1 // pred_check
      _
    $region15: #{vit_forward.23} parent=1 // pred_check_branch
      %18 = sbr.rel (0) target = $region17
    $region16: #{vit_forward.23} parent=1 // pred_region
      _
    $region17: #{vit_forward.23} parent=1 // pred_fallthru
      _
    // Predicated region
    $region18: #{vit_forward.23} parent=1 // pred_check
      _
    $region19: #{vit_forward.23} parent=1 // pred_check_branch
      %20 = sbr.rel (0) target = $region21
    $region20: #{vit_forward.23} parent=1 // pred_region
      _
    $region21: #{vit_forward.23} parent=1 // pred_fallthru
      _
    %p22 = scmp.eq.s32.totalorder 0, 0
    // Predicated region
    $region22: #{vit_forward.23} parent=1 // pred_check
      %p23 = pneg %p22
    $region23: #{vit_forward.23} parent=1 // pred_check_branch
      %25 = sbr.rel (%p23) target = $region25
    $region24: #{vit_forward.23} parent=1 // pred_region
      %26 = vst [vmem:[#allocation2] sm:$0x3] 0.0
    $region25: #{vit_forward.23} parent=1 // pred_fallthru
      _
    %v27 = vld [vmem:[%s0] sm:$0x3]
    %vm28 = vcmask 254976
    %v29 = vsel %vm28, %v27, 0.0
    %30 = vadd.xlane.f32.xlu0 %v29
    %v31 = vpop.xlane.xlu0 %30
    %v32 = vrcp.pop 32.0
    %v33 = vmul.f32 %v31, %v32
    %v34 = vsub.f32 %v27, %v33
    %v35 = vmul.f32 %v34, %v34
    %v36 = vsel %vm28, %v35, 0.0
    %37 = vadd.xlane.f32.xlu0 %v36
    %v38 = vpop.xlane.xlu0 %37
    %v39 = vmul.f32 %v38, %v32
    %v40 = vadd.f32 %v39, 1e-12
    %v41 = vrsqrt.pop %v40
    %v42 = vmul.f32 %v34, %v41
    %v43 = vld [vmem:[%s3] sm:$0x1]
    %v45 = vlaneseq
    %v46 = vshrl.u32 %v45, 7
    %v47 = vsub.s32 0, %v46
    %v48 = vrot.slane %v43, %v47
    %v50 = vmul.f32 %v42, %v48
    %v51 = vld [vmem:[%s4] sm:$0x1]
    %v53 = vlaneseq
    %v54 = vshrl.u32 %v53, 7
    %v55 = vsub.s32 0, %v54
    %v56 = vrot.slane %v51, %v55
    %v58 = vadd.f32 %v50, %v56
    %v59 = vld [vmem:[#allocation2] sm:$0x3]
    %v60 = vpack.c.bf16 %v58, %v58
    %v61 = vld [vmem:[%s1] sm:$0xf]
    %v62 = vld [vmem:[%s1 + $0x4] sm:$0xf]
    %v63 = vld [vmem:[%s1 + $0x8] sm:$0xf]
    %v64 = vld [vmem:[%s1 + $0xc] sm:$0xf]
    %v69 = vunpack.c.l.b16 %v61
    %v70 = vunpack.c.l.b16 %v62
    %v71 = vunpack.c.l.b16 %v63
    %v72 = vunpack.c.l.b16 %v64
    %v73 = vpack.c.b16 %v70, %v69
    %v74 = vpack.c.b16 %v72, %v71
    %vm77 = vcmask 261120
    %v79 = vsel %vm77, %v60, 0
    %81 = vmatprep.subr.bf16.mxu0 0
    %82 = vmatpush1.bf16.msra.mxu0 0
    %83 = vmatprep.subr.bf16.mxu0 0
    %84 = vmatpush1.bf16.msra.mxu0 0
    %85 = vmatprep.subr.bf16.mxu0 0
    %86 = vmatpush1.bf16.msra.mxu0 0
    %87 = vmatprep.subr.bf16.mxu0 0
    %88 = vmatpush1.bf16.msra.mxu0 0
    %89 = vmatprep.subr.bf16.mxu0 0
    %90 = vmatpush1.bf16.msra.mxu0 0
    %91 = vmatprep.subr.bf16.mxu0 0
    %92 = vmatpush1.bf16.msra.mxu0 0
    %93 = vmatprep.subr.bf16.mxu0 0
    %94 = vmatpush1.bf16.msra.mxu0 %v74
    %95 = vmatprep.subr.bf16.mxu0 0
    %96 = vmatpush1.bf16.msra.mxu0 %v73
    %97 = vmatprep.subr.bf16.mxu0 0
    %98 = vmatpush2.bf16.msra.mxu0 0
    %99 = vmatprep.subr.bf16.mxu0 0
    %100 = vmatpush2.bf16.msra.mxu0 0
    %101 = vmatprep.subr.bf16.mxu0 0
    %102 = vmatpush2.bf16.msra.mxu0 0
    %103 = vmatprep.subr.bf16.mxu0 0
    %104 = vmatpush2.bf16.msra.mxu0 0
    %105 = vmatprep.subr.bf16.mxu0 0
    %106 = vmatpush2.bf16.msra.mxu0 0
    %107 = vmatprep.subr.bf16.mxu0 0
    %108 = vmatpush2.bf16.msra.mxu0 0
    %109 = vmatprep.subr.bf16.mxu0 0
    %110 = vmatpush2.bf16.msra.mxu0 0
    %111 = vmatprep.subr.bf16.mxu0 0
    %112 = vmatpush2.bf16.msra.mxu0 0
    %113 = vmatprep.mubr.bf16.mxu0 0
    %114 = vmatmul.mubr.bf16.gmra.mxu0 %v79
    %v115 = vpop.f32.mrf.mxu0
    %v116 = vadd.f32 0.0, %v115
    %v117 = vpop.f32.mrf.mxu0
    %v118 = vpop.f32.mrf.mxu0
    %v119 = vpop.f32.mrf.mxu0
    %120 = vdwg.mxu0
    %v121 = vadd.f32 %v59, %v116
    %122 = vst [vmem:[#allocation2] sm:$0x3] %v121
    // Predicated region
    $region26: #{vit_forward.23} parent=1 // pred_check
      %p123 = pneg %p22
    $region27: #{vit_forward.23} parent=1 // pred_check_branch
      %125 = sbr.rel (%p123) target = $region29
    $region28: #{vit_forward.23} parent=1 // pred_region
      %v126 = vld [vmem:[#allocation2] sm:$0x3]
      %v127 = vld [vmem:[%s2] sm:$0x1]
      %v129 = vlaneseq
      %v130 = vshrl.u32 %v129, 7
      %v131 = vsub.s32 0, %v130
      %v132 = vrot.slane %v127, %v131
      %v134 = vadd.f32 %v126, %v132
      %135 = vst [vmem:[#allocation3] sm:$0x3] %v134
    $region29: #{vit_forward.23} parent=1 // pred_fallthru
      _
    // Predicated region
    $region30: #{vit_forward.23} parent=1 // pred_check
      _
    $region31: #{vit_forward.23} parent=1 // pred_check_branch
      %137 = sbr.rel (0) target = $region33
    $region32: #{vit_forward.23} parent=1 // pred_region
      %s139 = ssub.s32 32, 32
      %140 = vsyncadd [#allocation4], %s139
      %s142 = sshll.u32 [#allocation3], 4
      %s143 = int_to_ptr.vmem [resolvable:$true] %s142
      %145 = dma.vmem_to_hbm [thread:$0]  %s143, 32, %s5, [#allocation4]
    $region33: #{vit_forward.23} parent=1 // pred_fallthru
      _
    // Predicated region
    $region34: #{vit_forward.23} parent=1 // pred_check
      _
    $region35: #{vit_forward.23} parent=1 // pred_check_branch
      %147 = sbr.rel (0) target = $region37
    $region36: #{vit_forward.23} parent=1 // pred_region
      %148 = dma.done [#allocation4], 32
    $region37: #{vit_forward.23} parent=1 // pred_fallthru
      _
    %149 = vsyncpa [#allocation4], 1

</llo_original>
